<compile_context>
chip_gen: v7x
topology: tpu7x:2x2x1
jax: 0.10.0
libtpu: 0.0.40
codegen_flags: <defaults>
</compile_context>

<pallas_src>
import functools
import math

import numpy as np

import jax
import jax.numpy as jnp
from jax.experimental import pallas as pl
from jax.experimental.pallas import tpu as pltpu


# ----------------------------------------------------------------------------
# Fused Pallas kernel: GIN encoder -> (folded e2d + mask zeroing) -> GIN decoder
# ----------------------------------------------------------------------------
def _graphmae_fused_kernel(n_enc, layer_dims, a_ref, x_ref, keep_ref, w_ref, b_ref, o_ref):
    """All node-feature intermediates stay in VMEM/vregs.

    a_ref   : (N, N)        bf16  0/1 adjacency with self loops folded in (A + I)
    x_ref   : (N, 128)      bf16  masked node features
    keep_ref: (N, 1)        f32   1.0 for kept rows, 0.0 for mask_nodes
    w_ref   : (2L, 128,128) bf16  packed weight slab (decoder layer0 W1 has e2d folded in)
    b_ref   : (2L, 128)     f32   packed bias slab
    o_ref   : (N, 128)      f32   reconstruction (lane-dense)
    """
    a_hat = a_ref[...]                       # resident for all 8 layers
    h = x_ref[...]                           # bf16 carried between layers
    n_layers = len(layer_dims)

    for l, (din, dh, dout) in enumerate(layer_dims):
        # Static slices of the packed slabs (zero-cost view formation).
        w1 = w_ref[2 * l, :din, :dh]
        b1 = b_ref[2 * l: 2 * l + 1, :dh]
        w2 = w_ref[2 * l + 1, :dh, :dout]
        b2 = b_ref[2 * l + 1: 2 * l + 2, :dout]

        # GIN layer with eps=0 and self-loop folded into A_hat: MLP(A_hat @ H).
        # MXU dots in bf16 with f32 accumulation; bias/ReLU epilogue in f32 (v5e-safe).
        agg = jnp.dot(a_hat, h, preferred_element_type=jnp.float32)
        z = jnp.dot(agg.astype(jnp.bfloat16), w1,
                    preferred_element_type=jnp.float32) + b1
        z = jnp.maximum(z, 0.0)
        out = jnp.dot(z.astype(jnp.bfloat16), w2,
                      preferred_element_type=jnp.float32) + b2

        last_enc = (l == n_enc - 1)
        last_dec = (l == n_layers - 1)
        if not (last_enc or last_dec):
            out = jnp.maximum(out, 0.0)      # inter-layer ReLU (no act on stack outputs)
        if last_enc:
            # rep[mask_nodes] = 0, fused here; commutes with the folded e2d matmul.
            out = out * keep_ref[...]
        if last_dec:
            o_ref[...] = out                 # (N, 128) f32, lane-dense
        else:
            h = out.astype(jnp.bfloat16)     # single cast per layer boundary


def graphmae_fused(a_hat_bf16, x_bf16, keep_mask, w_slab, b_slab, layer_dims, n_enc):
    n, d_in = x_bf16.shape
    vmem = pl.BlockSpec(memory_space=pltpu.MemorySpace.VMEM)
    kern = functools.partial(_graphmae_fused_kernel, n_enc, layer_dims)
    return pl.pallas_call(
        kern,
        in_specs=[vmem] * 5,
        out_specs=vmem,
        out_shape=jax.ShapeDtypeStruct((n, d_in), jnp.float32),
        compiler_params=pltpu.CompilerParams(vmem_limit_bytes=32 * 1024 * 1024),
    )(a_hat_bf16, x_bf16, keep_mask, w_slab, b_slab)


# ----------------------------------------------------------------------------
# Parameter construction (deterministic) and one-time packing
# ----------------------------------------------------------------------------
def linear_params(key, fan_in, fan_out):
    bound = 1.0 / math.sqrt(fan_in)
    kw, kb = jax.random.split(key)
    w = jax.random.uniform(kw, (fan_in, fan_out), jnp.float32, -bound, bound)
    b = jax.random.uniform(kb, (1, fan_out), jnp.float32, -bound, bound)
    return w, b


def make_gin_params(key, num_layers, din, dh, dout):
    """Per-layer (W1, b1, W2, b2) for a GIN stack: din -> dh -> ... -> dh -> dout."""
    layers = []
    keys = jax.random.split(key, num_layers * 2)
    for l in range(num_layers):
        in_d = din if l == 0 else dh
        out_d = dout if l == num_layers - 1 else dh
        w1, b1 = linear_params(keys[2 * l], in_d, dh)
        w2, b2 = linear_params(keys[2 * l + 1], dh, out_d)
        layers.append((w1, b1, w2, b2))
    return layers


def pack_params(enc_params, dec_params, e2d_w):
    """One-time prep: fold e2d into decoder layer-0 W1 (in f32), then pack every weight
    into a (2L, 128, 128) bf16 slab and every bias into a (2L, 128) f32 slab."""
    dec_params = list(dec_params)
    w1_0, b1_0, w2_0, b2_0 = dec_params[0]
    w1_0_folded = np.asarray(e2d_w, np.float32) @ np.asarray(w1_0, np.float32)
    dec_params[0] = (w1_0_folded, b1_0, w2_0, b2_0)

    layers = list(enc_params) + dec_params
    n_w = 2 * len(layers)
    max_r = max(max(np.shape(w1)[0], np.shape(w2)[0]) for (w1, _, w2, _) in layers)
    max_c = max(max(np.shape(w1)[1], np.shape(w2)[1]) for (w1, _, w2, _) in layers)
    pr = -(-max_r // 16) * 16          # bf16 sublane packing
    pc = -(-max_c // 128) * 128        # lane width

    w_slab = np.zeros((n_w, pr, pc), np.float32)
    b_slab = np.zeros((n_w, pc), np.float32)
    dims = []
    for l, (w1, b1, w2, b2) in enumerate(layers):
        w1 = np.asarray(w1, np.float32)
        b1 = np.asarray(b1, np.float32)
        w2 = np.asarray(w2, np.float32)
        b2 = np.asarray(b2, np.float32)
        din, dh = w1.shape
        _, dout = w2.shape
        dims.append((int(din), int(dh), int(dout)))
        w_slab[2 * l, :din, :dh] = w1
        w_slab[2 * l + 1, :dh, :dout] = w2
        b_slab[2 * l, :dh] = b1[0]
        b_slab[2 * l + 1, :dout] = b2[0]
    return (jnp.asarray(w_slab, jnp.bfloat16),
            jnp.asarray(b_slab, jnp.float32),
            tuple(dims))


# ----------------------------------------------------------------------------
# GraphMAE forward (mask_attr_prediction)
# ----------------------------------------------------------------------------
@functools.partial(jax.jit,
                   static_argnames=("layer_dims", "n_enc", "mask_rate", "replace_rate"))
def graphmae_forward(key, a_hat_bf16, x, enc_mask_token, w_slab, b_slab, *,
                     layer_dims, n_enc, mask_rate=0.3, replace_rate=0.1):
    n = x.shape[0]
    k_perm, k_perm_mask, k_noise = jax.random.split(key, 3)

    # ---- encoding_mask_noise (index glue; plain JAX) ----
    perm = jax.random.permutation(k_perm, n)
    num_mask_nodes = int(mask_rate * n)
    mask_nodes = perm[:num_mask_nodes]
    # keep_nodes = perm[num_mask_nodes:]   (unused downstream)

    out_x = x
    if replace_rate > 0:
        num_noise_nodes = int(replace_rate * num_mask_nodes)
        perm_mask = jax.random.permutation(k_perm_mask, num_mask_nodes)
        token_nodes = mask_nodes[perm_mask[: int((1.0 - replace_rate) * num_mask_nodes)]]
        out_x = out_x.at[token_nodes].set(0.0)
        if num_noise_nodes > 0:
            noise_nodes = mask_nodes[perm_mask[-num_noise_nodes:]]
            noise_to_be_chosen = jax.random.permutation(k_noise, n)[:num_noise_nodes]
            out_x = out_x.at[noise_nodes].set(x[noise_to_be_chosen])
    else:
        token_nodes = mask_nodes
        out_x = out_x.at[token_nodes].set(0.0)
    out_x = out_x.at[token_nodes].add(enc_mask_token[0])

    # (N,1) keep-mask for the fused rep[mask_nodes] = 0 inside the kernel.
    keep_mask = jnp.ones((n, 1), jnp.float32).at[mask_nodes].set(0.0)

    # ---- fused encoder + (e2d folded) mask zeroing + decoder (single Pallas kernel) ----
    recon = graphmae_fused(a_hat_bf16, out_x.astype(jnp.bfloat16), keep_mask,
                           w_slab, b_slab, layer_dims, n_enc)

    # ---- gather masked rows ----
    x_init = jnp.take(x, mask_nodes, axis=0)
    x_rec = jnp.take(recon, mask_nodes, axis=0)
    return x_init, x_rec, out_x, mask_nodes


# ----------------------------------------------------------------------------
# Pure-JAX f32 reference (for a sanity check in __main__)
# ----------------------------------------------------------------------------
def _gin_stack_ref(a_hat, h, layers):
    for l, (w1, b1, w2, b2) in enumerate(layers):
        agg = a_hat @ h                      # eps = 0, self loop folded into a_hat
        z = jnp.maximum(agg @ w1 + b1, 0.0)
        h = z @ w2 + b2
        if l < len(layers) - 1:
            h = jnp.maximum(h, 0.0)
    return h


def graphmae_reference(a_hat, out_x, mask_nodes, enc_params, dec_params, e2d_w):
    h = _gin_stack_ref(a_hat, out_x, enc_params)
    rep = h @ e2d_w
    rep = rep.at[mask_nodes].set(0.0)
    return _gin_stack_ref(a_hat, rep, dec_params)


# ----------------------------------------------------------------------------
# Main
# ----------------------------------------------------------------------------
if __name__ == "__main__":
    # Shapes consistent with the module defaults
    # (num_layers=4, input_dimension=128, hidden_dimension=64, output_dimension=16).
    N = 64
    D_IN = 128
    D_HID = 64
    D_OUT = 16
    NUM_LAYERS = 4
    MASK_RATE, REPLACE_RATE = 0.3, 0.1

    root = jax.random.PRNGKey(0)
    k_x, k_adj, k_enc, k_dec, k_e2d, k_mask = jax.random.split(root, 6)

    # Node features and a dense random adjacency (symmetric, zero diagonal).
    x = jax.random.normal(k_x, (N, D_IN), jnp.float32)
    adj_u = (jax.random.uniform(k_adj, (N, N)) < 0.1).astype(jnp.float32)
    a = jnp.maximum(adj_u, adj_u.T) * (1.0 - jnp.eye(N, dtype=jnp.float32))

    # Self-loop fold + bf16 cast, hoisted out of the per-step path (A is static, 0/1).
    a_hat = a + jnp.eye(N, dtype=jnp.float32)
    a_hat_bf = a_hat.astype(jnp.bfloat16)

    params = {
        "encoder": make_gin_params(k_enc, NUM_LAYERS, D_IN, D_HID, D_OUT),
        # decoder: input = encoder output (16), hidden = 64, output = encoder input (128)
        "decoder": make_gin_params(k_dec, NUM_LAYERS, D_OUT, D_HID, D_IN),
        # encoder_to_decoder: Linear(16, 16, bias=False)
        "e2d_w": linear_params(k_e2d, D_OUT, D_OUT)[0],
        # enc_mask_token: nn.Parameter(torch.zeros(1, input_dim))
        "enc_mask_token": jnp.zeros((1, D_IN), jnp.float32),
    }

    # One-time parameter prep: fold e2d into decoder layer 0, pack into 2 slabs.
    w_slab, b_slab, layer_dims = pack_params(params["encoder"], params["decoder"],
                                             params["e2d_w"])

    x_init, x_rec, out_x, mask_nodes = graphmae_forward(
        k_mask, a_hat_bf, x, params["enc_mask_token"], w_slab, b_slab,
        layer_dims=layer_dims, n_enc=NUM_LAYERS,
        mask_rate=MASK_RATE, replace_rate=REPLACE_RATE)
    jax.block_until_ready((x_init, x_rec))

    num_mask = int(MASK_RATE * N)
    assert x_init.shape == (num_mask, D_IN), x_init.shape
    assert x_rec.shape == (num_mask, D_IN), x_rec.shape
    assert bool(jnp.all(jnp.isfinite(x_rec)))

    # Sanity check against the un-folded f32 reference (loose tol: bf16 MXU operands).
    recon_ref = graphmae_reference(a_hat, out_x, mask_nodes,
                                   params["encoder"], params["decoder"], params["e2d_w"])
    x_rec_ref = jnp.take(recon_ref, mask_nodes, axis=0)
    rel_err = jnp.linalg.norm(x_rec - x_rec_ref) / (jnp.linalg.norm(x_rec_ref) + 1e-6)
    assert float(rel_err) < 1e-1, float(rel_err)

    print("KERNEL_OK")
</pallas_src>

<mosaic_0001>
module attributes {stable_mosaic.version = 11 : i64} {
  func.func @_graphmae_fused_kernel(%arg0: memref<64x64xbf16, #tpu.memory_space<vmem>>, %arg1: memref<64x128xbf16, #tpu.memory_space<vmem>>, %arg2: memref<64x1xf32, #tpu.memory_space<vmem>>, %arg3: memref<16x128x128xbf16, #tpu.memory_space<vmem>>, %arg4: memref<16x128xf32, #tpu.memory_space<vmem>>, %arg5: memref<64x128xf32, #tpu.memory_space<vmem>>) attributes {dimension_semantics = [], scalar_prefetch = 0 : i64, scratch_operands = 0 : i64, tpu.core_type = #tpu.core_type<tc>} {
    %c0 = arith.constant 0 : index
    %c0_0 = arith.constant 0 : index
    %0 = vector.load %arg0[%c0, %c0_0] : memref<64x64xbf16, #tpu.memory_space<vmem>>, vector<64x64xbf16>
    %c0_1 = arith.constant 0 : index
    %c0_2 = arith.constant 0 : index
    %1 = vector.load %arg1[%c0_1, %c0_2] : memref<64x128xbf16, #tpu.memory_space<vmem>>, vector<64x128xbf16>
    %c0_3 = arith.constant 0 : index
    %c0_4 = arith.constant 0 : index
    %c0_5 = arith.constant 0 : index
    %2 = vector.load %arg3[%c0_3, %c0_4, %c0_5] : memref<16x128x128xbf16, #tpu.memory_space<vmem>>, vector<1x128x64xbf16>
    %3 = vector.shape_cast %2 : vector<1x128x64xbf16> to vector<128x64xbf16>
    %c0_6 = arith.constant 0 : index
    %c0_7 = arith.constant 0 : index
    %4 = vector.load %arg4[%c0_6, %c0_7] : memref<16x128xf32, #tpu.memory_space<vmem>>, vector<1x64xf32>
    %c1 = arith.constant 1 : index
    %c0_8 = arith.constant 0 : index
    %c0_9 = arith.constant 0 : index
    %5 = vector.load %arg3[%c1, %c0_8, %c0_9] : memref<16x128x128xbf16, #tpu.memory_space<vmem>>, vector<1x64x64xbf16>
    %6 = vector.shape_cast %5 : vector<1x64x64xbf16> to vector<64x64xbf16>
    %c1_10 = arith.constant 1 : index
    %c0_11 = arith.constant 0 : index
    %7 = vector.load %arg4[%c1_10, %c0_11] : memref<16x128xf32, #tpu.memory_space<vmem>>, vector<1x64xf32>
    %cst = arith.constant dense<0.000000e+00> : vector<64x128xf32>
    %8 = tpu.matmul %0, %1, %cst {dimension_numbers = #tpu.dot_dimension_numbers<[1], [0], [0], [1], [0, 0, 1, 1], [], []>} : vector<64x64xbf16>, vector<64x128xbf16>, vector<64x128xf32> -> vector<64x128xf32>
    %9 = arith.truncf %8 : vector<64x128xf32> to vector<64x128xbf16>
    %cst_12 = arith.constant dense<0.000000e+00> : vector<64x64xf32>
    %10 = tpu.matmul %9, %3, %cst_12 {dimension_numbers = #tpu.dot_dimension_numbers<[1], [0], [0], [1], [0, 0, 1, 1], [], []>} : vector<64x128xbf16>, vector<128x64xbf16>, vector<64x64xf32> -> vector<64x64xf32>
    %11 = vector.broadcast %4 : vector<1x64xf32> to vector<64x64xf32>
    %12 = arith.addf %10, %11 : vector<64x64xf32>
    %cst_13 = arith.constant 0.000000e+00 : f32
    %13 = vector.broadcast %cst_13 : f32 to vector<64x64xf32>
    %14 = arith.maximumf %12, %13 : vector<64x64xf32>
    %15 = arith.truncf %14 : vector<64x64xf32> to vector<64x64xbf16>
    %cst_14 = arith.constant dense<0.000000e+00> : vector<64x64xf32>
    %16 = tpu.matmul %15, %6, %cst_14 {dimension_numbers = #tpu.dot_dimension_numbers<[1], [0], [0], [1], [0, 0, 1, 1], [], []>} : vector<64x64xbf16>, vector<64x64xbf16>, vector<64x64xf32> -> vector<64x64xf32>
    %17 = vector.broadcast %7 : vector<1x64xf32> to vector<64x64xf32>
    %18 = arith.addf %16, %17 : vector<64x64xf32>
    %cst_15 = arith.constant 0.000000e+00 : f32
    %19 = vector.broadcast %cst_15 : f32 to vector<64x64xf32>
    %20 = arith.maximumf %18, %19 : vector<64x64xf32>
    %21 = arith.truncf %20 : vector<64x64xf32> to vector<64x64xbf16>
    %c2 = arith.constant 2 : index
    %c0_16 = arith.constant 0 : index
    %c0_17 = arith.constant 0 : index
    %22 = vector.load %arg3[%c2, %c0_16, %c0_17] : memref<16x128x128xbf16, #tpu.memory_space<vmem>>, vector<1x64x64xbf16>
    %23 = vector.shape_cast %22 : vector<1x64x64xbf16> to vector<64x64xbf16>
    %c2_18 = arith.constant 2 : index
    %c0_19 = arith.constant 0 : index
    %24 = vector.load %arg4[%c2_18, %c0_19] : memref<16x128xf32, #tpu.memory_space<vmem>>, vector<1x64xf32>
    %c3 = arith.constant 3 : index
    %c0_20 = arith.constant 0 : index
    %c0_21 = arith.constant 0 : index
    %25 = vector.load %arg3[%c3, %c0_20, %c0_21] : memref<16x128x128xbf16, #tpu.memory_space<vmem>>, vector<1x64x64xbf16>
    %26 = vector.shape_cast %25 : vector<1x64x64xbf16> to vector<64x64xbf16>
    %c3_22 = arith.constant 3 : index
    %c0_23 = arith.constant 0 : index
    %27 = vector.load %arg4[%c3_22, %c0_23] : memref<16x128xf32, #tpu.memory_space<vmem>>, vector<1x64xf32>
    %cst_24 = arith.constant dense<0.000000e+00> : vector<64x64xf32>
    %28 = tpu.matmul %0, %21, %cst_24 {dimension_numbers = #tpu.dot_dimension_numbers<[1], [0], [0], [1], [0, 0, 1, 1], [], []>} : vector<64x64xbf16>, vector<64x64xbf16>, vector<64x64xf32> -> vector<64x64xf32>
    %29 = arith.truncf %28 : vector<64x64xf32> to vector<64x64xbf16>
    %cst_25 = arith.constant dense<0.000000e+00> : vector<64x64xf32>
    %30 = tpu.matmul %29, %23, %cst_25 {dimension_numbers = #tpu.dot_dimension_numbers<[1], [0], [0], [1], [0, 0, 1, 1], [], []>} : vector<64x64xbf16>, vector<64x64xbf16>, vector<64x64xf32> -> vector<64x64xf32>
    %31 = vector.broadcast %24 : vector<1x64xf32> to vector<64x64xf32>
    %32 = arith.addf %30, %31 : vector<64x64xf32>
    %cst_26 = arith.constant 0.000000e+00 : f32
    %33 = vector.broadcast %cst_26 : f32 to vector<64x64xf32>
    %34 = arith.maximumf %32, %33 : vector<64x64xf32>
    %35 = arith.truncf %34 : vector<64x64xf32> to vector<64x64xbf16>
    %cst_27 = arith.constant dense<0.000000e+00> : vector<64x64xf32>
    %36 = tpu.matmul %35, %26, %cst_27 {dimension_numbers = #tpu.dot_dimension_numbers<[1], [0], [0], [1], [0, 0, 1, 1], [], []>} : vector<64x64xbf16>, vector<64x64xbf16>, vector<64x64xf32> -> vector<64x64xf32>
    %37 = vector.broadcast %27 : vector<1x64xf32> to vector<64x64xf32>
    %38 = arith.addf %36, %37 : vector<64x64xf32>
    %cst_28 = arith.constant 0.000000e+00 : f32
    %39 = vector.broadcast %cst_28 : f32 to vector<64x64xf32>
    %40 = arith.maximumf %38, %39 : vector<64x64xf32>
    %41 = arith.truncf %40 : vector<64x64xf32> to vector<64x64xbf16>
    %c4 = arith.constant 4 : index
    %c0_29 = arith.constant 0 : index
    %c0_30 = arith.constant 0 : index
    %42 = vector.load %arg3[%c4, %c0_29, %c0_30] : memref<16x128x128xbf16, #tpu.memory_space<vmem>>, vector<1x64x64xbf16>
    %43 = vector.shape_cast %42 : vector<1x64x64xbf16> to vector<64x64xbf16>
    %c4_31 = arith.constant 4 : index
    %c0_32 = arith.constant 0 : index
    %44 = vector.load %arg4[%c4_31, %c0_32] : memref<16x128xf32, #tpu.memory_space<vmem>>, vector<1x64xf32>
    %c5 = arith.constant 5 : index
    %c0_33 = arith.constant 0 : index
    %c0_34 = arith.constant 0 : index
    %45 = vector.load %arg3[%c5, %c0_33, %c0_34] : memref<16x128x128xbf16, #tpu.memory_space<vmem>>, vector<1x64x64xbf16>
    %46 = vector.shape_cast %45 : vector<1x64x64xbf16> to vector<64x64xbf16>
    %c5_35 = arith.constant 5 : index
    %c0_36 = arith.constant 0 : index
    %47 = vector.load %arg4[%c5_35, %c0_36] : memref<16x128xf32, #tpu.memory_space<vmem>>, vector<1x64xf32>
    %cst_37 = arith.constant dense<0.000000e+00> : vector<64x64xf32>
    %48 = tpu.matmul %0, %41, %cst_37 {dimension_numbers = #tpu.dot_dimension_numbers<[1], [0], [0], [1], [0, 0, 1, 1], [], []>} : vector<64x64xbf16>, vector<64x64xbf16>, vector<64x64xf32> -> vector<64x64xf32>
    %49 = arith.truncf %48 : vector<64x64xf32> to vector<64x64xbf16>
    %cst_38 = arith.constant dense<0.000000e+00> : vector<64x64xf32>
    %50 = tpu.matmul %49, %43, %cst_38 {dimension_numbers = #tpu.dot_dimension_numbers<[1], [0], [0], [1], [0, 0, 1, 1], [], []>} : vector<64x64xbf16>, vector<64x64xbf16>, vector<64x64xf32> -> vector<64x64xf32>
    %51 = vector.broadcast %44 : vector<1x64xf32> to vector<64x64xf32>
    %52 = arith.addf %50, %51 : vector<64x64xf32>
    %cst_39 = arith.constant 0.000000e+00 : f32
    %53 = vector.broadcast %cst_39 : f32 to vector<64x64xf32>
    %54 = arith.maximumf %52, %53 : vector<64x64xf32>
    %55 = arith.truncf %54 : vector<64x64xf32> to vector<64x64xbf16>
    %cst_40 = arith.constant dense<0.000000e+00> : vector<64x64xf32>
    %56 = tpu.matmul %55, %46, %cst_40 {dimension_numbers = #tpu.dot_dimension_numbers<[1], [0], [0], [1], [0, 0, 1, 1], [], []>} : vector<64x64xbf16>, vector<64x64xbf16>, vector<64x64xf32> -> vector<64x64xf32>
    %57 = vector.broadcast %47 : vector<1x64xf32> to vector<64x64xf32>
    %58 = arith.addf %56, %57 : vector<64x64xf32>
    %cst_41 = arith.constant 0.000000e+00 : f32
    %59 = vector.broadcast %cst_41 : f32 to vector<64x64xf32>
    %60 = arith.maximumf %58, %59 : vector<64x64xf32>
    %61 = arith.truncf %60 : vector<64x64xf32> to vector<64x64xbf16>
    %c6 = arith.constant 6 : index
    %c0_42 = arith.constant 0 : index
    %c0_43 = arith.constant 0 : index
    %62 = vector.load %arg3[%c6, %c0_42, %c0_43] : memref<16x128x128xbf16, #tpu.memory_space<vmem>>, vector<1x64x64xbf16>
    %63 = vector.shape_cast %62 : vector<1x64x64xbf16> to vector<64x64xbf16>
    %c6_44 = arith.constant 6 : index
    %c0_45 = arith.constant 0 : index
    %64 = vector.load %arg4[%c6_44, %c0_45] : memref<16x128xf32, #tpu.memory_space<vmem>>, vector<1x64xf32>
    %c7 = arith.constant 7 : index
    %c0_46 = arith.constant 0 : index
    %c0_47 = arith.constant 0 : index
    %65 = vector.load %arg3[%c7, %c0_46, %c0_47] : memref<16x128x128xbf16, #tpu.memory_space<vmem>>, vector<1x64x16xbf16>
    %66 = vector.shape_cast %65 : vector<1x64x16xbf16> to vector<64x16xbf16>
    %c7_48 = arith.constant 7 : index
    %c0_49 = arith.constant 0 : index
    %67 = vector.load %arg4[%c7_48, %c0_49] : memref<16x128xf32, #tpu.memory_space<vmem>>, vector<1x16xf32>
    %cst_50 = arith.constant dense<0.000000e+00> : vector<64x64xf32>
    %68 = tpu.matmul %0, %61, %cst_50 {dimension_numbers = #tpu.dot_dimension_numbers<[1], [0], [0], [1], [0, 0, 1, 1], [], []>} : vector<64x64xbf16>, vector<64x64xbf16>, vector<64x64xf32> -> vector<64x64xf32>
    %69 = arith.truncf %68 : vector<64x64xf32> to vector<64x64xbf16>
    %cst_51 = arith.constant dense<0.000000e+00> : vector<64x64xf32>
    %70 = tpu.matmul %69, %63, %cst_51 {dimension_numbers = #tpu.dot_dimension_numbers<[1], [0], [0], [1], [0, 0, 1, 1], [], []>} : vector<64x64xbf16>, vector<64x64xbf16>, vector<64x64xf32> -> vector<64x64xf32>
    %71 = vector.broadcast %64 : vector<1x64xf32> to vector<64x64xf32>
    %72 = arith.addf %70, %71 : vector<64x64xf32>
    %cst_52 = arith.constant 0.000000e+00 : f32
    %73 = vector.broadcast %cst_52 : f32 to vector<64x64xf32>
    %74 = arith.maximumf %72, %73 : vector<64x64xf32>
    %75 = arith.truncf %74 : vector<64x64xf32> to vector<64x64xbf16>
    %cst_53 = arith.constant dense<0.000000e+00> : vector<64x16xf32>
    %76 = tpu.matmul %75, %66, %cst_53 {dimension_numbers = #tpu.dot_dimension_numbers<[1], [0], [0], [1], [0, 0, 1, 1], [], []>} : vector<64x64xbf16>, vector<64x16xbf16>, vector<64x16xf32> -> vector<64x16xf32>
    %77 = vector.broadcast %67 : vector<1x16xf32> to vector<64x16xf32>
    %78 = arith.addf %76, %77 : vector<64x16xf32>
    %c0_54 = arith.constant 0 : index
    %c0_55 = arith.constant 0 : index
    %79 = vector.load %arg2[%c0_54, %c0_55] : memref<64x1xf32, #tpu.memory_space<vmem>>, vector<64x1xf32>
    %80 = vector.broadcast %79 : vector<64x1xf32> to vector<64x16xf32>
    %81 = arith.mulf %78, %80 : vector<64x16xf32>
    %82 = arith.truncf %81 : vector<64x16xf32> to vector<64x16xbf16>
    %c8 = arith.constant 8 : index
    %c0_56 = arith.constant 0 : index
    %c0_57 = arith.constant 0 : index
    %83 = vector.load %arg3[%c8, %c0_56, %c0_57] : memref<16x128x128xbf16, #tpu.memory_space<vmem>>, vector<1x16x64xbf16>
    %84 = vector.shape_cast %83 : vector<1x16x64xbf16> to vector<16x64xbf16>
    %c8_58 = arith.constant 8 : index
    %c0_59 = arith.constant 0 : index
    %85 = vector.load %arg4[%c8_58, %c0_59] : memref<16x128xf32, #tpu.memory_space<vmem>>, vector<1x64xf32>
    %c9 = arith.constant 9 : index
    %c0_60 = arith.constant 0 : index
    %c0_61 = arith.constant 0 : index
    %86 = vector.load %arg3[%c9, %c0_60, %c0_61] : memref<16x128x128xbf16, #tpu.memory_space<vmem>>, vector<1x64x64xbf16>
    %87 = vector.shape_cast %86 : vector<1x64x64xbf16> to vector<64x64xbf16>
    %c9_62 = arith.constant 9 : index
    %c0_63 = arith.constant 0 : index
    %88 = vector.load %arg4[%c9_62, %c0_63] : memref<16x128xf32, #tpu.memory_space<vmem>>, vector<1x64xf32>
    %cst_64 = arith.constant dense<0.000000e+00> : vector<64x16xf32>
    %89 = tpu.matmul %0, %82, %cst_64 {dimension_numbers = #tpu.dot_dimension_numbers<[1], [0], [0], [1], [0, 0, 1, 1], [], []>} : vector<64x64xbf16>, vector<64x16xbf16>, vector<64x16xf32> -> vector<64x16xf32>
    %90 = arith.truncf %89 : vector<64x16xf32> to vector<64x16xbf16>
    %cst_65 = arith.constant dense<0.000000e+00> : vector<64x64xf32>
    %91 = tpu.matmul %90, %84, %cst_65 {dimension_numbers = #tpu.dot_dimension_numbers<[1], [0], [0], [1], [0, 0, 1, 1], [], []>} : vector<64x16xbf16>, vector<16x64xbf16>, vector<64x64xf32> -> vector<64x64xf32>
    %92 = vector.broadcast %85 : vector<1x64xf32> to vector<64x64xf32>
    %93 = arith.addf %91, %92 : vector<64x64xf32>
    %cst_66 = arith.constant 0.000000e+00 : f32
    %94 = vector.broadcast %cst_66 : f32 to vector<64x64xf32>
    %95 = arith.maximumf %93, %94 : vector<64x64xf32>
    %96 = arith.truncf %95 : vector<64x64xf32> to vector<64x64xbf16>
    %cst_67 = arith.constant dense<0.000000e+00> : vector<64x64xf32>
    %97 = tpu.matmul %96, %87, %cst_67 {dimension_numbers = #tpu.dot_dimension_numbers<[1], [0], [0], [1], [0, 0, 1, 1], [], []>} : vector<64x64xbf16>, vector<64x64xbf16>, vector<64x64xf32> -> vector<64x64xf32>
    %98 = vector.broadcast %88 : vector<1x64xf32> to vector<64x64xf32>
    %99 = arith.addf %97, %98 : vector<64x64xf32>
    %cst_68 = arith.constant 0.000000e+00 : f32
    %100 = vector.broadcast %cst_68 : f32 to vector<64x64xf32>
    %101 = arith.maximumf %99, %100 : vector<64x64xf32>
    %102 = arith.truncf %101 : vector<64x64xf32> to vector<64x64xbf16>
    %c10 = arith.constant 10 : index
    %c0_69 = arith.constant 0 : index
    %c0_70 = arith.constant 0 : index
    %103 = vector.load %arg3[%c10, %c0_69, %c0_70] : memref<16x128x128xbf16, #tpu.memory_space<vmem>>, vector<1x64x64xbf16>
    %104 = vector.shape_cast %103 : vector<1x64x64xbf16> to vector<64x64xbf16>
    %c10_71 = arith.constant 10 : index
    %c0_72 = arith.constant 0 : index
    %105 = vector.load %arg4[%c10_71, %c0_72] : memref<16x128xf32, #tpu.memory_space<vmem>>, vector<1x64xf32>
    %c11 = arith.constant 11 : index
    %c0_73 = arith.constant 0 : index
    %c0_74 = arith.constant 0 : index
    %106 = vector.load %arg3[%c11, %c0_73, %c0_74] : memref<16x128x128xbf16, #tpu.memory_space<vmem>>, vector<1x64x64xbf16>
    %107 = vector.shape_cast %106 : vector<1x64x64xbf16> to vector<64x64xbf16>
    %c11_75 = arith.constant 11 : index
    %c0_76 = arith.constant 0 : index
    %108 = vector.load %arg4[%c11_75, %c0_76] : memref<16x128xf32, #tpu.memory_space<vmem>>, vector<1x64xf32>
    %cst_77 = arith.constant dense<0.000000e+00> : vector<64x64xf32>
    %109 = tpu.matmul %0, %102, %cst_77 {dimension_numbers = #tpu.dot_dimension_numbers<[1], [0], [0], [1], [0, 0, 1, 1], [], []>} : vector<64x64xbf16>, vector<64x64xbf16>, vector<64x64xf32> -> vector<64x64xf32>
    %110 = arith.truncf %109 : vector<64x64xf32> to vector<64x64xbf16>
    %cst_78 = arith.constant dense<0.000000e+00> : vector<64x64xf32>
    %111 = tpu.matmul %110, %104, %cst_78 {dimension_numbers = #tpu.dot_dimension_numbers<[1], [0], [0], [1], [0, 0, 1, 1], [], []>} : vector<64x64xbf16>, vector<64x64xbf16>, vector<64x64xf32> -> vector<64x64xf32>
    %112 = vector.broadcast %105 : vector<1x64xf32> to vector<64x64xf32>
    %113 = arith.addf %111, %112 : vector<64x64xf32>
    %cst_79 = arith.constant 0.000000e+00 : f32
    %114 = vector.broadcast %cst_79 : f32 to vector<64x64xf32>
    %115 = arith.maximumf %113, %114 : vector<64x64xf32>
    %116 = arith.truncf %115 : vector<64x64xf32> to vector<64x64xbf16>
    %cst_80 = arith.constant dense<0.000000e+00> : vector<64x64xf32>
    %117 = tpu.matmul %116, %107, %cst_80 {dimension_numbers = #tpu.dot_dimension_numbers<[1], [0], [0], [1], [0, 0, 1, 1], [], []>} : vector<64x64xbf16>, vector<64x64xbf16>, vector<64x64xf32> -> vector<64x64xf32>
    %118 = vector.broadcast %108 : vector<1x64xf32> to vector<64x64xf32>
    %119 = arith.addf %117, %118 : vector<64x64xf32>
    %cst_81 = arith.constant 0.000000e+00 : f32
    %120 = vector.broadcast %cst_81 : f32 to vector<64x64xf32>
    %121 = arith.maximumf %119, %120 : vector<64x64xf32>
    %122 = arith.truncf %121 : vector<64x64xf32> to vector<64x64xbf16>
    %c12 = arith.constant 12 : index
    %c0_82 = arith.constant 0 : index
    %c0_83 = arith.constant 0 : index
    %123 = vector.load %arg3[%c12, %c0_82, %c0_83] : memref<16x128x128xbf16, #tpu.memory_space<vmem>>, vector<1x64x64xbf16>
    %124 = vector.shape_cast %123 : vector<1x64x64xbf16> to vector<64x64xbf16>
    %c12_84 = arith.constant 12 : index
    %c0_85 = arith.constant 0 : index
    %125 = vector.load %arg4[%c12_84, %c0_85] : memref<16x128xf32, #tpu.memory_space<vmem>>, vector<1x64xf32>
    %c13 = arith.constant 13 : index
    %c0_86 = arith.constant 0 : index
    %c0_87 = arith.constant 0 : index
    %126 = vector.load %arg3[%c13, %c0_86, %c0_87] : memref<16x128x128xbf16, #tpu.memory_space<vmem>>, vector<1x64x64xbf16>
    %127 = vector.shape_cast %126 : vector<1x64x64xbf16> to vector<64x64xbf16>
    %c13_88 = arith.constant 13 : index
    %c0_89 = arith.constant 0 : index
    %128 = vector.load %arg4[%c13_88, %c0_89] : memref<16x128xf32, #tpu.memory_space<vmem>>, vector<1x64xf32>
    %cst_90 = arith.constant dense<0.000000e+00> : vector<64x64xf32>
    %129 = tpu.matmul %0, %122, %cst_90 {dimension_numbers = #tpu.dot_dimension_numbers<[1], [0], [0], [1], [0, 0, 1, 1], [], []>} : vector<64x64xbf16>, vector<64x64xbf16>, vector<64x64xf32> -> vector<64x64xf32>
    %130 = arith.truncf %129 : vector<64x64xf32> to vector<64x64xbf16>
    %cst_91 = arith.constant dense<0.000000e+00> : vector<64x64xf32>
    %131 = tpu.matmul %130, %124, %cst_91 {dimension_numbers = #tpu.dot_dimension_numbers<[1], [0], [0], [1], [0, 0, 1, 1], [], []>} : vector<64x64xbf16>, vector<64x64xbf16>, vector<64x64xf32> -> vector<64x64xf32>
    %132 = vector.broadcast %125 : vector<1x64xf32> to vector<64x64xf32>
    %133 = arith.addf %131, %132 : vector<64x64xf32>
    %cst_92 = arith.constant 0.000000e+00 : f32
    %134 = vector.broadcast %cst_92 : f32 to vector<64x64xf32>
    %135 = arith.maximumf %133, %134 : vector<64x64xf32>
    %136 = arith.truncf %135 : vector<64x64xf32> to vector<64x64xbf16>
    %cst_93 = arith.constant dense<0.000000e+00> : vector<64x64xf32>
    %137 = tpu.matmul %136, %127, %cst_93 {dimension_numbers = #tpu.dot_dimension_numbers<[1], [0], [0], [1], [0, 0, 1, 1], [], []>} : vector<64x64xbf16>, vector<64x64xbf16>, vector<64x64xf32> -> vector<64x64xf32>
    %138 = vector.broadcast %128 : vector<1x64xf32> to vector<64x64xf32>
    %139 = arith.addf %137, %138 : vector<64x64xf32>
    %cst_94 = arith.constant 0.000000e+00 : f32
    %140 = vector.broadcast %cst_94 : f32 to vector<64x64xf32>
    %141 = arith.maximumf %139, %140 : vector<64x64xf32>
    %142 = arith.truncf %141 : vector<64x64xf32> to vector<64x64xbf16>
    %c14 = arith.constant 14 : index
    %c0_95 = arith.constant 0 : index
    %c0_96 = arith.constant 0 : index
    %143 = vector.load %arg3[%c14, %c0_95, %c0_96] : memref<16x128x128xbf16, #tpu.memory_space<vmem>>, vector<1x64x64xbf16>
    %144 = vector.shape_cast %143 : vector<1x64x64xbf16> to vector<64x64xbf16>
    %c14_97 = arith.constant 14 : index
    %c0_98 = arith.constant 0 : index
    %145 = vector.load %arg4[%c14_97, %c0_98] : memref<16x128xf32, #tpu.memory_space<vmem>>, vector<1x64xf32>
    %c15 = arith.constant 15 : index
    %c0_99 = arith.constant 0 : index
    %c0_100 = arith.constant 0 : index
    %146 = vector.load %arg3[%c15, %c0_99, %c0_100] : memref<16x128x128xbf16, #tpu.memory_space<vmem>>, vector<1x64x128xbf16>
    %147 = vector.shape_cast %146 : vector<1x64x128xbf16> to vector<64x128xbf16>
    %c15_101 = arith.constant 15 : index
    %c0_102 = arith.constant 0 : index
    %148 = vector.load %arg4[%c15_101, %c0_102] : memref<16x128xf32, #tpu.memory_space<vmem>>, vector<1x128xf32>
    %cst_103 = arith.constant dense<0.000000e+00> : vector<64x64xf32>
    %149 = tpu.matmul %0, %142, %cst_103 {dimension_numbers = #tpu.dot_dimension_numbers<[1], [0], [0], [1], [0, 0, 1, 1], [], []>} : vector<64x64xbf16>, vector<64x64xbf16>, vector<64x64xf32> -> vector<64x64xf32>
    %150 = arith.truncf %149 : vector<64x64xf32> to vector<64x64xbf16>
    %cst_104 = arith.constant dense<0.000000e+00> : vector<64x64xf32>
    %151 = tpu.matmul %150, %144, %cst_104 {dimension_numbers = #tpu.dot_dimension_numbers<[1], [0], [0], [1], [0, 0, 1, 1], [], []>} : vector<64x64xbf16>, vector<64x64xbf16>, vector<64x64xf32> -> vector<64x64xf32>
    %152 = vector.broadcast %145 : vector<1x64xf32> to vector<64x64xf32>
    %153 = arith.addf %151, %152 : vector<64x64xf32>
    %cst_105 = arith.constant 0.000000e+00 : f32
    %154 = vector.broadcast %cst_105 : f32 to vector<64x64xf32>
    %155 = arith.maximumf %153, %154 : vector<64x64xf32>
    %156 = arith.truncf %155 : vector<64x64xf32> to vector<64x64xbf16>
    %cst_106 = arith.constant dense<0.000000e+00> : vector<64x128xf32>
    %157 = tpu.matmul %156, %147, %cst_106 {dimension_numbers = #tpu.dot_dimension_numbers<[1], [0], [0], [1], [0, 0, 1, 1], [], []>} : vector<64x64xbf16>, vector<64x128xbf16>, vector<64x128xf32> -> vector<64x128xf32>
    %158 = vector.broadcast %148 : vector<1x128xf32> to vector<64x128xf32>
    %159 = arith.addf %157, %158 : vector<64x128xf32>
    %c0_107 = arith.constant 0 : index
    %c0_108 = arith.constant 0 : index
    %160 = vector.load %arg5[%c0_107, %c0_108] : memref<64x128xf32, #tpu.memory_space<vmem>>, vector<64x128xf32>
    tpu.vector_store %arg5[%c0_107, %c0_108], %159 {strides = array<i32>} : memref<64x128xf32, #tpu.memory_space<vmem>>, vector<64x128xf32>,
    return
  }
}

</mosaic_0001>

<llo_original>
// kernel: graphmae_forward.3
$region0: #{graphmae_forward.3}
  #allocation0 [shape = 'u32[]', space=smem, size = 0x4, offset = 0x4, fixed_abs, tag = 'smem constant byte address 0x4 - core index']
  #allocation1 [shape = 'u32[144,128]{1,0:T(1,128)}', space=vmem, size = 0x12000, scoped, tag = 'internal scratch']
  %s0 = inlined_call_operand.vmem [shape: bf16[64,64], index: 0, kind: input, shape index: {}]
  %s1 = inlined_call_operand.vmem [shape: bf16[64,128], index: 1, kind: input, shape index: {}]
  %s2 = inlined_call_operand.vmem [shape: f32[64,1], index: 2, kind: input, shape index: {}]
  %s3 = inlined_call_operand.vmem [shape: bf16[16,128,128], index: 3, kind: input, shape index: {}]
  %s4 = inlined_call_operand.vmem [shape: f32[16,128], index: 4, kind: input, shape index: {}]
  %s5 = inlined_call_operand.vmem [shape: f32[64,128], index: 5, kind: output, shape index: {}]
  %s6 = sld [smem:[#allocation0]]
  $region30: #{graphmae_forward.3} parent=0
    _
  %s8 = ssub.s32 1, %s6
  %s9 = scalar_select 0, %s8, %s6
  // Predicated region
  $region2: #{graphmae_forward.3} parent=0 // pred_check
    _
  $region3: #{graphmae_forward.3} parent=0 // pred_check_branch
    %11 = sbr.rel (0) target = $region5
  $region4: #{graphmae_forward.3} parent=0 // pred_region
    _
  $region5: #{graphmae_forward.3} parent=0 // pred_fallthru
    _
  // Predicated region
  $region6: #{graphmae_forward.3} parent=0 // pred_check
    _
  $region7: #{graphmae_forward.3} parent=0 // pred_check_branch
    %13 = sbr.rel (0) target = $region9
  $region8: #{graphmae_forward.3} parent=0 // pred_region
    _
  $region9: #{graphmae_forward.3} parent=0 // pred_fallthru
    _
  // Predicated region
  $region10: #{graphmae_forward.3} parent=0 // pred_check
    _
  $region11: #{graphmae_forward.3} parent=0 // pred_check_branch
    %15 = sbr.rel (0) target = $region13
  $region12: #{graphmae_forward.3} parent=0 // pred_region
    _
  $region13: #{graphmae_forward.3} parent=0 // pred_fallthru
    _
  // Predicated region
  $region14: #{graphmae_forward.3} parent=0 // pred_check
    _
  $region15: #{graphmae_forward.3} parent=0 // pred_check_branch
    %17 = sbr.rel (0) target = $region17
  $region16: #{graphmae_forward.3} parent=0 // pred_region
    _
  $region17: #{graphmae_forward.3} parent=0 // pred_fallthru
    _
  // Predicated region
  $region18: #{graphmae_forward.3} parent=0 // pred_check
    _
  $region19: #{graphmae_forward.3} parent=0 // pred_check_branch
    %19 = sbr.rel (0) target = $region21
  $region20: #{graphmae_forward.3} parent=0 // pred_region
    _
  $region21: #{graphmae_forward.3} parent=0 // pred_fallthru
    _
  %v21 = vld [vmem:[%s0] sm:$0xf]
  %v22 = vld [vmem:[%s0 + $0x4] sm:$0xf]
  %v23 = vld [vmem:[%s0 + $0x8] sm:$0xf]
  %v24 = vld [vmem:[%s0 + $0xc] sm:$0xf]
  %v25 = vld [vmem:[%s0 + $0x10] sm:$0xf]
  %v26 = vld [vmem:[%s0 + $0x14] sm:$0xf]
  %v27 = vld [vmem:[%s0 + $0x18] sm:$0xf]
  %v28 = vld [vmem:[%s0 + $0x1c] sm:$0xf]
  %v29 = vld [vmem:[%s1] sm:$0xf]
  %v30 = vld [vmem:[%s1 + $0x4] sm:$0xf]
  %v31 = vld [vmem:[%s1 + $0x8] sm:$0xf]
  %v32 = vld [vmem:[%s1 + $0xc] sm:$0xf]
  %v33 = vld [vmem:[%s1 + $0x10] sm:$0xf]
  %v34 = vld [vmem:[%s1 + $0x14] sm:$0xf]
  %v35 = vld [vmem:[%s1 + $0x18] sm:$0xf]
  %v36 = vld [vmem:[%s1 + $0x1c] sm:$0xf]
  %v37 = vld [vmem:[%s3] sm:$0xf]
  %v38 = vld [vmem:[%s3 + $0x4] sm:$0xf]
  %v39 = vld [vmem:[%s3 + $0x8] sm:$0xf]
  %v40 = vld [vmem:[%s3 + $0xc] sm:$0xf]
  %v41 = vld [vmem:[%s3 + $0x10] sm:$0xf]
  %v42 = vld [vmem:[%s3 + $0x14] sm:$0xf]
  %v43 = vld [vmem:[%s3 + $0x18] sm:$0xf]
  %v44 = vld [vmem:[%s3 + $0x1c] sm:$0xf]
  %v45 = vld [vmem:[%s3 + $0x20] sm:$0xf]
  %v46 = vld [vmem:[%s3 + $0x24] sm:$0xf]
  %v47 = vld [vmem:[%s3 + $0x28] sm:$0xf]
  %v48 = vld [vmem:[%s3 + $0x2c] sm:$0xf]
  %v49 = vld [vmem:[%s3 + $0x30] sm:$0xf]
  %v50 = vld [vmem:[%s3 + $0x34] sm:$0xf]
  %v51 = vld [vmem:[%s3 + $0x38] sm:$0xf]
  %v52 = vld [vmem:[%s3 + $0x3c] sm:$0xf]
  %v53 = vld [vmem:[%s4] sm:$0x1]
  %s54 = scalar_lea.vmem %s3, 64
  %v55 = vld [vmem:[%s54] sm:$0xf]
  %v56 = vld [vmem:[%s54 + $0x4] sm:$0xf]
  %v57 = vld [vmem:[%s54 + $0x8] sm:$0xf]
  %v58 = vld [vmem:[%s54 + $0xc] sm:$0xf]
  %v59 = vld [vmem:[%s54 + $0x10] sm:$0xf]
  %v60 = vld [vmem:[%s54 + $0x14] sm:$0xf]
  %v61 = vld [vmem:[%s54 + $0x18] sm:$0xf]
  %v62 = vld [vmem:[%s54 + $0x1c] sm:$0xf]
  %v63 = vld [vmem:[%s4 + $0x1] sm:$0x1]
  %v72 = vunpack.c.l.b16 %v21
  %v73 = vunpack.c.l.b16 %v22
  %v74 = vunpack.c.l.b16 %v23
  %v75 = vunpack.c.l.b16 %v24
  %v76 = vunpack.c.l.b16 %v25
  %v77 = vunpack.c.l.b16 %v26
  %v78 = vunpack.c.l.b16 %v27
  %v79 = vunpack.c.l.b16 %v28
  %v80 = vpack.c.b16 %v73, %v72
  %v81 = vpack.c.b16 %v75, %v74
  %v82 = vpack.c.b16 %v77, %v76
  %v83 = vpack.c.b16 %v79, %v78
  %v92 = vunpack.c.l.b16 %v29
  %v93 = vunpack.c.l.b16 %v30
  %v94 = vunpack.c.l.b16 %v31
  %v95 = vunpack.c.l.b16 %v32
  %v96 = vunpack.c.l.b16 %v33
  %v97 = vunpack.c.l.b16 %v34
  %v98 = vunpack.c.l.b16 %v35
  %v99 = vunpack.c.l.b16 %v36
  %v100 = vpack.c.b16 %v93, %v92
  %v101 = vpack.c.b16 %v95, %v94
  %v102 = vpack.c.b16 %v97, %v96
  %v103 = vpack.c.b16 %v99, %v98
  %vm108 = vcmask 523264
  %v110 = vsel %vm108, %v80, 0
  %v113 = vsel %vm108, %v81, 0
  %v116 = vsel %vm108, %v82, 0
  %v119 = vsel %vm108, %v83, 0
  %121 = vmatprep.subr.bf16.mxu0 0
  %122 = vmatpush1.bf16.msra.mxu0 %v100
  %123 = vmatprep.subr.bf16.mxu0 0
  %124 = vmatpush1.bf16.msra.mxu0 %v101
  %125 = vmatprep.subr.bf16.mxu0 0
  %126 = vmatpush1.bf16.msra.mxu0 %v102
  %127 = vmatprep.subr.bf16.mxu0 0
  %128 = vmatpush1.bf16.msra.mxu0 %v103
  %129 = vmatprep.subr.bf16.mxu0 0
  %130 = vmatpush1.bf16.msra.mxu0 0
  %131 = vmatprep.subr.bf16.mxu0 0
  %132 = vmatpush1.bf16.msra.mxu0 0
  %133 = vmatprep.subr.bf16.mxu0 0
  %134 = vmatpush1.bf16.msra.mxu0 0
  %135 = vmatprep.subr.bf16.mxu0 0
  %136 = vmatpush1.bf16.msra.mxu0 0
  %137 = vmatprep.subr.bf16.mxu0 0
  %138 = vmatpush1.bf16.msra.mxu0 0
  %139 = vmatprep.subr.bf16.mxu0 0
  %140 = vmatpush1.bf16.msra.mxu0 0
  %141 = vmatprep.subr.bf16.mxu0 0
  %142 = vmatpush1.bf16.msra.mxu0 0
  %143 = vmatprep.subr.bf16.mxu0 0
  %144 = vmatpush1.bf16.msra.mxu0 0
  %145 = vmatprep.subr.bf16.mxu0 0
  %146 = vmatpush1.bf16.msra.mxu0 0
  %147 = vmatprep.subr.bf16.mxu0 0
  %148 = vmatpush1.bf16.msra.mxu0 0
  %149 = vmatprep.subr.bf16.mxu0 0
  %150 = vmatpush1.bf16.msra.mxu0 0
  %151 = vmatprep.subr.bf16.mxu0 0
  %152 = vmatpush1.bf16.msra.mxu0 0
  %153 = vmatprep.mubr.bf16.mxu0 0
  %154 = vmatmul.mubr.bf16.gmra.mrb[0].mxu0 %v110
  %v155 = vpop.f32.mrb[0].mxu0
  %v156 = vadd.f32 0.0, %v155
  %v157 = vpop.f32.mrb[0].mxu0
  %v158 = vpop.f32.mrb[0].mxu0
  %v159 = vadd.f32 0.0, %v158
  %v160 = vpop.f32.mrb[0].mxu0
  %161 = vmatprep.mubr.bf16.mxu0 0
  %162 = vmatmul.mubr.bf16.gmra.mrb[0].mxu0 %v113
  %v163 = vpop.f32.mrb[0].mxu0
  %v164 = vadd.f32 0.0, %v163
  %v165 = vpop.f32.mrb[0].mxu0
  %v166 = vpop.f32.mrb[0].mxu0
  %v167 = vadd.f32 0.0, %v166
  %v168 = vpop.f32.mrb[0].mxu0
  %169 = vmatprep.mubr.bf16.mxu0 0
  %170 = vmatmul.mubr.bf16.gmra.mrb[0].mxu0 %v116
  %v171 = vpop.f32.mrb[0].mxu0
  %v172 = vadd.f32 0.0, %v171
  %v173 = vpop.f32.mrb[0].mxu0
  %v174 = vpop.f32.mrb[0].mxu0
  %v175 = vadd.f32 0.0, %v174
  %v176 = vpop.f32.mrb[0].mxu0
  %177 = vmatprep.mubr.bf16.mxu0 0
  %178 = vmatmul.mubr.bf16.gmra.mrb[0].mxu0 %v119
  %v179 = vpop.f32.mrb[0].mxu0
  %v180 = vadd.f32 0.0, %v179
  %v181 = vpop.f32.mrb[0].mxu0
  %v182 = vpop.f32.mrb[0].mxu0
  %v183 = vadd.f32 0.0, %v182
  %v184 = vpop.f32.mrb[0].mxu0
  %185 = vdwg.mxu0
  %v186 = vpack.c.bf16 %v159, %v156
  %v187 = vpack.c.bf16 %v167, %v164
  %v188 = vpack.c.bf16 %v175, %v172
  %v189 = vpack.c.bf16 %v183, %v180
  %v190 = vlaneseq
  %v191 = vshrl.u32 %v190, 7
  %v192 = vsub.s32 0, %v191
  %v193 = vrot.slane %v53, %v192
  %v210 = vunpack.c.l.b16 %v37
  %v211 = vunpack.c.l.b16 %v38
  %v212 = vunpack.c.l.b16 %v39
  %v213 = vunpack.c.l.b16 %v40
  %v214 = vunpack.c.l.b16 %v41
  %v215 = vunpack.c.l.b16 %v42
  %v216 = vunpack.c.l.b16 %v43
  %v217 = vunpack.c.l.b16 %v44
  %v218 = vunpack.c.l.b16 %v45
  %v219 = vunpack.c.l.b16 %v46
  %v220 = vunpack.c.l.b16 %v47
  %v221 = vunpack.c.l.b16 %v48
  %v222 = vunpack.c.l.b16 %v49
  %v223 = vunpack.c.l.b16 %v50
  %v224 = vunpack.c.l.b16 %v51
  %v225 = vunpack.c.l.b16 %v52
  %v226 = vpack.c.b16 %v211, %v210
  %v227 = vpack.c.b16 %v213, %v212
  %v228 = vpack.c.b16 %v215, %v214
  %v229 = vpack.c.b16 %v217, %v216
  %v230 = vpack.c.b16 %v219, %v218
  %v231 = vpack.c.b16 %v221, %v220
  %v232 = vpack.c.b16 %v223, %v222
  %v233 = vpack.c.b16 %v225, %v224
  %242 = vmatprep.subr.bf16.mxu0 0
  %243 = vmatpush1.bf16.msra.mxu0 %v226
  %244 = vmatprep.subr.bf16.mxu0 0
  %245 = vmatpush1.bf16.msra.mxu0 %v227
  %246 = vmatprep.subr.bf16.mxu0 0
  %247 = vmatpush1.bf16.msra.mxu0 %v228
  %248 = vmatprep.subr.bf16.mxu0 0
  %249 = vmatpush1.bf16.msra.mxu0 %v229
  %250 = vmatprep.subr.bf16.mxu0 0
  %251 = vmatpush1.bf16.msra.mxu0 %v230
  %252 = vmatprep.subr.bf16.mxu0 0
  %253 = vmatpush1.bf16.msra.mxu0 %v231
  %254 = vmatprep.subr.bf16.mxu0 0
  %255 = vmatpush1.bf16.msra.mxu0 %v232
  %256 = vmatprep.subr.bf16.mxu0 0
  %257 = vmatpush1.bf16.msra.mxu0 %v233
  %258 = vmatprep.subr.bf16.mxu0 0
  %259 = vmatpush1.bf16.msra.mxu0 0
  %260 = vmatprep.subr.bf16.mxu0 0
  %261 = vmatpush1.bf16.msra.mxu0 0
  %262 = vmatprep.subr.bf16.mxu0 0
  %263 = vmatpush1.bf16.msra.mxu0 0
  %264 = vmatprep.subr.bf16.mxu0 0
  %265 = vmatpush1.bf16.msra.mxu0 0
  %266 = vmatprep.subr.bf16.mxu0 0
  %267 = vmatpush1.bf16.msra.mxu0 0
  %268 = vmatprep.subr.bf16.mxu0 0
  %269 = vmatpush1.bf16.msra.mxu0 0
  %270 = vmatprep.subr.bf16.mxu0 0
  %271 = vmatpush1.bf16.msra.mxu0 0
  %272 = vmatprep.subr.bf16.mxu0 0
  %273 = vmatpush1.bf16.msra.mxu0 0
  %274 = vmatprep.mubr.bf16.mxu0 0
  %275 = vmatmul.mubr.bf16.gmra.mrb[0].mxu0 %v186
  %v276 = vpop.f32.mrb[0].mxu0
  %v277 = vadd.f32 %v193, %v276
  %v278 = vpop.f32.mrb[0].mxu0
  %v279 = vpop.f32.mrb[0].mxu0
  %v280 = vadd.f32 %v193, %v279
  %v281 = vpop.f32.mrb[0].mxu0
  %282 = vmatprep.mubr.bf16.mxu0 0
  %283 = vmatmul.mubr.bf16.gmra.mrb[0].mxu0 %v187
  %v284 = vpop.f32.mrb[0].mxu0
  %v285 = vadd.f32 %v193, %v284
  %v286 = vpop.f32.mrb[0].mxu0
  %v287 = vpop.f32.mrb[0].mxu0
  %v288 = vadd.f32 %v193, %v287
  %v289 = vpop.f32.mrb[0].mxu0
  %290 = vmatprep.mubr.bf16.mxu0 0
  %291 = vmatmul.mubr.bf16.gmra.mrb[0].mxu0 %v188
  %v292 = vpop.f32.mrb[0].mxu0
  %v293 = vadd.f32 %v193, %v292
  %v294 = vpop.f32.mrb[0].mxu0
  %v295 = vpop.f32.mrb[0].mxu0
  %v296 = vadd.f32 %v193, %v295
  %v297 = vpop.f32.mrb[0].mxu0
  %298 = vmatprep.mubr.bf16.mxu0 0
  %299 = vmatmul.mubr.bf16.gmra.mrb[0].mxu0 %v189
  %v300 = vpop.f32.mrb[0].mxu0
  %v301 = vadd.f32 %v193, %v300
  %v302 = vpop.f32.mrb[0].mxu0
  %v303 = vpop.f32.mrb[0].mxu0
  %v304 = vadd.f32 %v193, %v303
  %v305 = vpop.f32.mrb[0].mxu0
  %306 = vdwg.mxu0
  %v307 = vmax.f32 %v277, 0.0
  %v308 = vmax.f32 %v280, 0.0
  %v309 = vmax.f32 %v285, 0.0
  %v310 = vmax.f32 %v288, 0.0
  %v311 = vmax.f32 %v293, 0.0
  %v312 = vmax.f32 %v296, 0.0
  %v313 = vmax.f32 %v301, 0.0
  %v314 = vmax.f32 %v304, 0.0
  %v315 = vpack.c.bf16 %v308, %v307
  %v316 = vpack.c.bf16 %v310, %v309
  %v317 = vpack.c.bf16 %v312, %v311
  %v318 = vpack.c.bf16 %v314, %v313
  %v319 = vlaneseq
  %v320 = vshrl.u32 %v319, 7
  %v321 = vsub.s32 0, %v320
  %v322 = vrot.slane %v63, %v321
  %v331 = vunpack.c.l.b16 %v55
  %v332 = vunpack.c.l.b16 %v56
  %v333 = vunpack.c.l.b16 %v57
  %v334 = vunpack.c.l.b16 %v58
  %v335 = vunpack.c.l.b16 %v59
  %v336 = vunpack.c.l.b16 %v60
  %v337 = vunpack.c.l.b16 %v61
  %v338 = vunpack.c.l.b16 %v62
  %v339 = vpack.c.b16 %v332, %v331
  %v340 = vpack.c.b16 %v334, %v333
  %v341 = vpack.c.b16 %v336, %v335
  %v342 = vpack.c.b16 %v338, %v337
  %v348 = vsel %vm108, %v315, 0
  %v351 = vsel %vm108, %v316, 0
  %v354 = vsel %vm108, %v317, 0
  %v357 = vsel %vm108, %v318, 0
  %359 = vmatprep.subr.bf16.mxu0 0
  %360 = vmatpush1.bf16.msra.mxu0 %v339
  %361 = vmatprep.subr.bf16.mxu0 0
  %362 = vmatpush1.bf16.msra.mxu0 %v340
  %363 = vmatprep.subr.bf16.mxu0 0
  %364 = vmatpush1.bf16.msra.mxu0 %v341
  %365 = vmatprep.subr.bf16.mxu0 0
  %366 = vmatpush1.bf16.msra.mxu0 %v342
  %367 = vmatprep.subr.bf16.mxu0 0
  %368 = vmatpush1.bf16.msra.mxu0 0
  %369 = vmatprep.subr.bf16.mxu0 0
  %370 = vmatpush1.bf16.msra.mxu0 0
  %371 = vmatprep.subr.bf16.mxu0 0
  %372 = vmatpush1.bf16.msra.mxu0 0
  %373 = vmatprep.subr.bf16.mxu0 0
  %374 = vmatpush1.bf16.msra.mxu0 0
  %375 = vmatprep.subr.bf16.mxu0 0
  %376 = vmatpush1.bf16.msra.mxu0 0
  %377 = vmatprep.subr.bf16.mxu0 0
  %378 = vmatpush1.bf16.msra.mxu0 0
  %379 = vmatprep.subr.bf16.mxu0 0
  %380 = vmatpush1.bf16.msra.mxu0 0
  %381 = vmatprep.subr.bf16.mxu0 0
  %382 = vmatpush1.bf16.msra.mxu0 0
  %383 = vmatprep.subr.bf16.mxu0 0
  %384 = vmatpush1.bf16.msra.mxu0 0
  %385 = vmatprep.subr.bf16.mxu0 0
  %386 = vmatpush1.bf16.msra.mxu0 0
  %387 = vmatprep.subr.bf16.mxu0 0
  %388 = vmatpush1.bf16.msra.mxu0 0
  %389 = vmatprep.subr.bf16.mxu0 0
  %390 = vmatpush1.bf16.msra.mxu0 0
  %391 = vmatprep.mubr.bf16.mxu0 0
  %392 = vmatmul.mubr.bf16.gmra.mrb[0].mxu0 %v348
  %v393 = vpop.f32.mrb[0].mxu0
  %v394 = vadd.f32 %v322, %v393
  %v395 = vpop.f32.mrb[0].mxu0
  %v396 = vpop.f32.mrb[0].mxu0
  %v397 = vadd.f32 %v322, %v396
  %v398 = vpop.f32.mrb[0].mxu0
  %399 = vmatprep.mubr.bf16.mxu0 0
  %400 = vmatmul.mubr.bf16.gmra.mrb[0].mxu0 %v351
  %v401 = vpop.f32.mrb[0].mxu0
  %v402 = vadd.f32 %v322, %v401
  %v403 = vpop.f32.mrb[0].mxu0
  %v404 = vpop.f32.mrb[0].mxu0
  %v405 = vadd.f32 %v322, %v404
  %v406 = vpop.f32.mrb[0].mxu0
  %407 = vmatprep.mubr.bf16.mxu0 0
  %408 = vmatmul.mubr.bf16.gmra.mrb[0].mxu0 %v354
  %v409 = vpop.f32.mrb[0].mxu0
  %v410 = vadd.f32 %v322, %v409
  %v411 = vpop.f32.mrb[0].mxu0
  %v412 = vpop.f32.mrb[0].mxu0
  %v413 = vadd.f32 %v322, %v412
  %v414 = vpop.f32.mrb[0].mxu0
  %415 = vmatprep.mubr.bf16.mxu0 0
  %416 = vmatmul.mubr.bf16.gmra.mrb[0].mxu0 %v357
  %v417 = vpop.f32.mrb[0].mxu0
  %v418 = vadd.f32 %v322, %v417
  %v419 = vpop.f32.mrb[0].mxu0
  %v420 = vpop.f32.mrb[0].mxu0
  %v421 = vadd.f32 %v322, %v420
  %v422 = vpop.f32.mrb[0].mxu0
  %423 = vdwg.mxu0
  %v424 = vmax.f32 %v394, 0.0
  %v425 = vmax.f32 %v397, 0.0
  %v426 = vmax.f32 %v402, 0.0
  %v427 = vmax.f32 %v405, 0.0
  %v428 = vmax.f32 %v410, 0.0
  %v429 = vmax.f32 %v413, 0.0
  %v430 = vmax.f32 %v418, 0.0
  %v431 = vmax.f32 %v421, 0.0
  %v432 = vpack.c.bf16 %v425, %v424
  %v433 = vpack.c.bf16 %v427, %v426
  %v434 = vpack.c.bf16 %v429, %v428
  %v435 = vpack.c.bf16 %v431, %v430
  %s436 = scalar_lea.vmem %s3, 128
  %v437 = vld [vmem:[%s436] sm:$0xf]
  %v438 = vld [vmem:[%s436 + $0x4] sm:$0xf]
  %v439 = vld [vmem:[%s436 + $0x8] sm:$0xf]
  %v440 = vld [vmem:[%s436 + $0xc] sm:$0xf]
  %v441 = vld [vmem:[%s436 + $0x10] sm:$0xf]
  %v442 = vld [vmem:[%s436 + $0x14] sm:$0xf]
  %v443 = vld [vmem:[%s436 + $0x18] sm:$0xf]
  %v444 = vld [vmem:[%s436 + $0x1c] sm:$0xf]
  %v445 = vld [vmem:[%s4 + $0x2] sm:$0x1]
  %s446 = scalar_lea.vmem %s3, 192
  %v447 = vld [vmem:[%s446] sm:$0xf]
  %v448 = vld [vmem:[%s446 + $0x4] sm:$0xf]
  %v449 = vld [vmem:[%s446 + $0x8] sm:$0xf]
  %v450 = vld [vmem:[%s446 + $0xc] sm:$0xf]
  %v451 = vld [vmem:[%s446 + $0x10] sm:$0xf]
  %v452 = vld [vmem:[%s446 + $0x14] sm:$0xf]
  %v453 = vld [vmem:[%s446 + $0x18] sm:$0xf]
  %v454 = vld [vmem:[%s446 + $0x1c] sm:$0xf]
  %v455 = vld [vmem:[%s4 + $0x3] sm:$0x1]
  %456 = vmatprep.subr.bf16.mxu0 0
  %457 = vmatpush1.bf16.msra.mxu0 %v432
  %458 = vmatprep.subr.bf16.mxu0 0
  %459 = vmatpush1.bf16.msra.mxu0 %v433
  %460 = vmatprep.subr.bf16.mxu0 0
  %461 = vmatpush1.bf16.msra.mxu0 %v434
  %462 = vmatprep.subr.bf16.mxu0 0
  %463 = vmatpush1.bf16.msra.mxu0 %v435
  %464 = vmatprep.subr.bf16.mxu0 0
  %465 = vmatpush1.bf16.msra.mxu0 0
  %466 = vmatprep.subr.bf16.mxu0 0
  %467 = vmatpush1.bf16.msra.mxu0 0
  %468 = vmatprep.subr.bf16.mxu0 0
  %469 = vmatpush1.bf16.msra.mxu0 0
  %470 = vmatprep.subr.bf16.mxu0 0
  %471 = vmatpush1.bf16.msra.mxu0 0
  %472 = vmatprep.subr.bf16.mxu0 0
  %473 = vmatpush1.bf16.msra.mxu0 0
  %474 = vmatprep.subr.bf16.mxu0 0
  %475 = vmatpush1.bf16.msra.mxu0 0
  %476 = vmatprep.subr.bf16.mxu0 0
  %477 = vmatpush1.bf16.msra.mxu0 0
  %478 = vmatprep.subr.bf16.mxu0 0
  %479 = vmatpush1.bf16.msra.mxu0 0
  %480 = vmatprep.subr.bf16.mxu0 0
  %481 = vmatpush1.bf16.msra.mxu0 0
  %482 = vmatprep.subr.bf16.mxu0 0
  %483 = vmatpush1.bf16.msra.mxu0 0
  %484 = vmatprep.subr.bf16.mxu0 0
  %485 = vmatpush1.bf16.msra.mxu0 0
  %486 = vmatprep.subr.bf16.mxu0 0
  %487 = vmatpush1.bf16.msra.mxu0 0
  %488 = vmatprep.mubr.bf16.mxu0 0
  %489 = vmatmul.mubr.bf16.gmra.mrb[0].mxu0 %v110
  %v490 = vpop.f32.mrb[0].mxu0
  %v491 = vadd.f32 0.0, %v490
  %v492 = vpop.f32.mrb[0].mxu0
  %v493 = vpop.f32.mrb[0].mxu0
  %v494 = vadd.f32 0.0, %v493
  %v495 = vpop.f32.mrb[0].mxu0
  %496 = vmatprep.mubr.bf16.mxu0 0
  %497 = vmatmul.mubr.bf16.gmra.mrb[0].mxu0 %v113
  %v498 = vpop.f32.mrb[0].mxu0
  %v499 = vadd.f32 0.0, %v498
  %v500 = vpop.f32.mrb[0].mxu0
  %v501 = vpop.f32.mrb[0].mxu0
  %v502 = vadd.f32 0.0, %v501
  %v503 = vpop.f32.mrb[0].mxu0
  %504 = vmatprep.mubr.bf16.mxu0 0
  %505 = vmatmul.mubr.bf16.gmra.mrb[0].mxu0 %v116
  %v506 = vpop.f32.mrb[0].mxu0
  %v507 = vadd.f32 0.0, %v506
  %v508 = vpop.f32.mrb[0].mxu0
  %v509 = vpop.f32.mrb[0].mxu0
  %v510 = vadd.f32 0.0, %v509
  %v511 = vpop.f32.mrb[0].mxu0
  %512 = vmatprep.mubr.bf16.mxu0 0
  %513 = vmatmul.mubr.bf16.gmra.mrb[0].mxu0 %v119
  %v514 = vpop.f32.mrb[0].mxu0
  %v515 = vadd.f32 0.0, %v514
  %v516 = vpop.f32.mrb[0].mxu0
  %v517 = vpop.f32.mrb[0].mxu0
  %v518 = vadd.f32 0.0, %v517
  %v519 = vpop.f32.mrb[0].mxu0
  %520 = vdwg.mxu0
  %v521 = vpack.c.bf16 %v494, %v491
  %v522 = vpack.c.bf16 %v502, %v499
  %v523 = vpack.c.bf16 %v510, %v507
  %v524 = vpack.c.bf16 %v518, %v515
  %v525 = vlaneseq
  %v526 = vshrl.u32 %v525, 7
  %v527 = vsub.s32 0, %v526
  %v528 = vrot.slane %v445, %v527
  %v537 = vunpack.c.l.b16 %v437
  %v538 = vunpack.c.l.b16 %v438
  %v539 = vunpack.c.l.b16 %v439
  %v540 = vunpack.c.l.b16 %v440
  %v541 = vunpack.c.l.b16 %v441
  %v542 = vunpack.c.l.b16 %v442
  %v543 = vunpack.c.l.b16 %v443
  %v544 = vunpack.c.l.b16 %v444
  %v545 = vpack.c.b16 %v538, %v537
  %v546 = vpack.c.b16 %v540, %v539
  %v547 = vpack.c.b16 %v542, %v541
  %v548 = vpack.c.b16 %v544, %v543
  %v554 = vsel %vm108, %v521, 0
  %v557 = vsel %vm108, %v522, 0
  %v560 = vsel %vm108, %v523, 0
  %v563 = vsel %vm108, %v524, 0
  %565 = vmatprep.subr.bf16.mxu0 0
  %566 = vmatpush1.bf16.msra.mxu0 %v545
  %567 = vmatprep.subr.bf16.mxu0 0
  %568 = vmatpush1.bf16.msra.mxu0 %v546
  %569 = vmatprep.subr.bf16.mxu0 0
  %570 = vmatpush1.bf16.msra.mxu0 %v547
  %571 = vmatprep.subr.bf16.mxu0 0
  %572 = vmatpush1.bf16.msra.mxu0 %v548
  %573 = vmatprep.subr.bf16.mxu0 0
  %574 = vmatpush1.bf16.msra.mxu0 0
  %575 = vmatprep.subr.bf16.mxu0 0
  %576 = vmatpush1.bf16.msra.mxu0 0
  %577 = vmatprep.subr.bf16.mxu0 0
  %578 = vmatpush1.bf16.msra.mxu0 0
  %579 = vmatprep.subr.bf16.mxu0 0
  %580 = vmatpush1.bf16.msra.mxu0 0
  %581 = vmatprep.subr.bf16.mxu0 0
  %582 = vmatpush1.bf16.msra.mxu0 0
  %583 = vmatprep.subr.bf16.mxu0 0
  %584 = vmatpush1.bf16.msra.mxu0 0
  %585 = vmatprep.subr.bf16.mxu0 0
  %586 = vmatpush1.bf16.msra.mxu0 0
  %587 = vmatprep.subr.bf16.mxu0 0
  %588 = vmatpush1.bf16.msra.mxu0 0
  %589 = vmatprep.subr.bf16.mxu0 0
  %590 = vmatpush1.bf16.msra.mxu0 0
  %591 = vmatprep.subr.bf16.mxu0 0
  %592 = vmatpush1.bf16.msra.mxu0 0
  %593 = vmatprep.subr.bf16.mxu0 0
  %594 = vmatpush1.bf16.msra.mxu0 0
  %595 = vmatprep.subr.bf16.mxu0 0
  %596 = vmatpush1.bf16.msra.mxu0 0
  %597 = vmatprep.mubr.bf16.mxu0 0
  %598 = vmatmul.mubr.bf16.gmra.mrb[0].mxu0 %v554
  %v599 = vpop.f32.mrb[0].mxu0
  %v600 = vadd.f32 %v528, %v599
  %v601 = vpop.f32.mrb[0].mxu0
  %v602 = vpop.f32.mrb[0].mxu0
  %v603 = vadd.f32 %v528, %v602
  %v604 = vpop.f32.mrb[0].mxu0
  %605 = vmatprep.mubr.bf16.mxu0 0
  %606 = vmatmul.mubr.bf16.gmra.mrb[0].mxu0 %v557
  %v607 = vpop.f32.mrb[0].mxu0
  %v608 = vadd.f32 %v528, %v607
  %v609 = vpop.f32.mrb[0].mxu0
  %v610 = vpop.f32.mrb[0].mxu0
  %v611 = vadd.f32 %v528, %v610
  %v612 = vpop.f32.mrb[0].mxu0
  %613 = vmatprep.mubr.bf16.mxu0 0
  %614 = vmatmul.mubr.bf16.gmra.mrb[0].mxu0 %v560
  %v615 = vpop.f32.mrb[0].mxu0
  %v616 = vadd.f32 %v528, %v615
  %v617 = vpop.f32.mrb[0].mxu0
  %v618 = vpop.f32.mrb[0].mxu0
  %v619 = vadd.f32 %v528, %v618
  %v620 = vpop.f32.mrb[0].mxu0
  %621 = vmatprep.mubr.bf16.mxu0 0
  %622 = vmatmul.mubr.bf16.gmra.mrb[0].mxu0 %v563
  %v623 = vpop.f32.mrb[0].mxu0
  %v624 = vadd.f32 %v528, %v623
  %v625 = vpop.f32.mrb[0].mxu0
  %v626 = vpop.f32.mrb[0].mxu0
  %v627 = vadd.f32 %v528, %v626
  %v628 = vpop.f32.mrb[0].mxu0
  %629 = vdwg.mxu0
  %v630 = vmax.f32 %v600, 0.0
  %v631 = vmax.f32 %v603, 0.0
  %v632 = vmax.f32 %v608, 0.0
  %v633 = vmax.f32 %v611, 0.0
  %v634 = vmax.f32 %v616, 0.0
  %v635 = vmax.f32 %v619, 0.0
  %v636 = vmax.f32 %v624, 0.0
  %v637 = vmax.f32 %v627, 0.0
  %v638 = vpack.c.bf16 %v631, %v630
  %v639 = vpack.c.bf16 %v633, %v632
  %v640 = vpack.c.bf16 %v635, %v634
  %v641 = vpack.c.bf16 %v637, %v636
  %v642 = vlaneseq
  %v643 = vshrl.u32 %v642, 7
  %v644 = vsub.s32 0, %v643
  %v645 = vrot.slane %v455, %v644
  %v654 = vunpack.c.l.b16 %v447
  %v655 = vunpack.c.l.b16 %v448
  %v656 = vunpack.c.l.b16 %v449
  %v657 = vunpack.c.l.b16 %v450
  %v658 = vunpack.c.l.b16 %v451
  %v659 = vunpack.c.l.b16 %v452
  %v660 = vunpack.c.l.b16 %v453
  %v661 = vunpack.c.l.b16 %v454
  %v662 = vpack.c.b16 %v655, %v654
  %v663 = vpack.c.b16 %v657, %v656
  %v664 = vpack.c.b16 %v659, %v658
  %v665 = vpack.c.b16 %v661, %v660
  %v671 = vsel %vm108, %v638, 0
  %v674 = vsel %vm108, %v639, 0
  %v677 = vsel %vm108, %v640, 0
  %v680 = vsel %vm108, %v641, 0
  %682 = vmatprep.subr.bf16.mxu0 0
  %683 = vmatpush1.bf16.msra.mxu0 %v662
  %684 = vmatprep.subr.bf16.mxu0 0
  %685 = vmatpush1.bf16.msra.mxu0 %v663
  %686 = vmatprep.subr.bf16.mxu0 0
  %687 = vmatpush1.bf16.msra.mxu0 %v664
  %688 = vmatprep.subr.bf16.mxu0 0
  %689 = vmatpush1.bf16.msra.mxu0 %v665
  %690 = vmatprep.subr.bf16.mxu0 0
  %691 = vmatpush1.bf16.msra.mxu0 0
  %692 = vmatprep.subr.bf16.mxu0 0
  %693 = vmatpush1.bf16.msra.mxu0 0
  %694 = vmatprep.subr.bf16.mxu0 0
  %695 = vmatpush1.bf16.msra.mxu0 0
  %696 = vmatprep.subr.bf16.mxu0 0
  %697 = vmatpush1.bf16.msra.mxu0 0
  %698 = vmatprep.subr.bf16.mxu0 0
  %699 = vmatpush1.bf16.msra.mxu0 0
  %700 = vmatprep.subr.bf16.mxu0 0
  %701 = vmatpush1.bf16.msra.mxu0 0
  %702 = vmatprep.subr.bf16.mxu0 0
  %703 = vmatpush1.bf16.msra.mxu0 0
  %704 = vmatprep.subr.bf16.mxu0 0
  %705 = vmatpush1.bf16.msra.mxu0 0
  %706 = vmatprep.subr.bf16.mxu0 0
  %707 = vmatpush1.bf16.msra.mxu0 0
  %708 = vmatprep.subr.bf16.mxu0 0
  %709 = vmatpush1.bf16.msra.mxu0 0
  %710 = vmatprep.subr.bf16.mxu0 0
  %711 = vmatpush1.bf16.msra.mxu0 0
  %712 = vmatprep.subr.bf16.mxu0 0
  %713 = vmatpush1.bf16.msra.mxu0 0
  %714 = vmatprep.mubr.bf16.mxu0 0
  %715 = vmatmul.mubr.bf16.gmra.mrb[0].mxu0 %v671
  %v716 = vpop.f32.mrb[0].mxu0
  %v717 = vadd.f32 %v645, %v716
  %v718 = vpop.f32.mrb[0].mxu0
  %v719 = vpop.f32.mrb[0].mxu0
  %v720 = vadd.f32 %v645, %v719
  %v721 = vpop.f32.mrb[0].mxu0
  %722 = vmatprep.mubr.bf16.mxu0 0
  %723 = vmatmul.mubr.bf16.gmra.mrb[0].mxu0 %v674
  %v724 = vpop.f32.mrb[0].mxu0
  %v725 = vadd.f32 %v645, %v724
  %v726 = vpop.f32.mrb[0].mxu0
  %v727 = vpop.f32.mrb[0].mxu0
  %v728 = vadd.f32 %v645, %v727
  %v729 = vpop.f32.mrb[0].mxu0
  %730 = vmatprep.mubr.bf16.mxu0 0
  %731 = vmatmul.mubr.bf16.gmra.mrb[0].mxu0 %v677
  %v732 = vpop.f32.mrb[0].mxu0
  %v733 = vadd.f32 %v645, %v732
  %v734 = vpop.f32.mrb[0].mxu0
  %v735 = vpop.f32.mrb[0].mxu0
  %v736 = vadd.f32 %v645, %v735
  %v737 = vpop.f32.mrb[0].mxu0
  %738 = vmatprep.mubr.bf16.mxu0 0
  %739 = vmatmul.mubr.bf16.gmra.mrb[0].mxu0 %v680
  %v740 = vpop.f32.mrb[0].mxu0
  %v741 = vadd.f32 %v645, %v740
  %v742 = vpop.f32.mrb[0].mxu0
  %v743 = vpop.f32.mrb[0].mxu0
  %v744 = vadd.f32 %v645, %v743
  %v745 = vpop.f32.mrb[0].mxu0
  %746 = vdwg.mxu0
  %v747 = vmax.f32 %v717, 0.0
  %v748 = vmax.f32 %v720, 0.0
  %v749 = vmax.f32 %v725, 0.0
  %v750 = vmax.f32 %v728, 0.0
  %v751 = vmax.f32 %v733, 0.0
  %v752 = vmax.f32 %v736, 0.0
  %v753 = vmax.f32 %v741, 0.0
  %v754 = vmax.f32 %v744, 0.0
  %v755 = vpack.c.bf16 %v748, %v747
  %v756 = vpack.c.bf16 %v750, %v749
  %v757 = vpack.c.bf16 %v752, %v751
  %v758 = vpack.c.bf16 %v754, %v753
  %s759 = scalar_lea.vmem %s3, 256
  %v760 = vld [vmem:[%s759] sm:$0xf]
  %v761 = vld [vmem:[%s759 + $0x4] sm:$0xf]
  %v762 = vld [vmem:[%s759 + $0x8] sm:$0xf]
  %v763 = vld [vmem:[%s759 + $0xc] sm:$0xf]
  %v764 = vld [vmem:[%s759 + $0x10] sm:$0xf]
  %v765 = vld [vmem:[%s759 + $0x14] sm:$0xf]
  %v766 = vld [vmem:[%s759 + $0x18] sm:$0xf]
  %v767 = vld [vmem:[%s759 + $0x1c] sm:$0xf]
  %v768 = vld [vmem:[%s4 + $0x4] sm:$0x1]
  %s769 = scalar_lea.vmem %s3, 320
  %v770 = vld [vmem:[%s769] sm:$0xf]
  %v771 = vld [vmem:[%s769 + $0x4] sm:$0xf]
  %v772 = vld [vmem:[%s769 + $0x8] sm:$0xf]
  %v773 = vld [vmem:[%s769 + $0xc] sm:$0xf]
  %v774 = vld [vmem:[%s769 + $0x10] sm:$0xf]
  %v775 = vld [vmem:[%s769 + $0x14] sm:$0xf]
  %v776 = vld [vmem:[%s769 + $0x18] sm:$0xf]
  %v777 = vld [vmem:[%s769 + $0x1c] sm:$0xf]
  %v778 = vld [vmem:[%s4 + $0x5] sm:$0x1]
  %779 = vmatprep.subr.bf16.mxu0 0
  %780 = vmatpush1.bf16.msra.mxu0 %v755
  %781 = vmatprep.subr.bf16.mxu0 0
  %782 = vmatpush1.bf16.msra.mxu0 %v756
  %783 = vmatprep.subr.bf16.mxu0 0
  %784 = vmatpush1.bf16.msra.mxu0 %v757
  %785 = vmatprep.subr.bf16.mxu0 0
  %786 = vmatpush1.bf16.msra.mxu0 %v758
  %787 = vmatprep.subr.bf16.mxu0 0
  %788 = vmatpush1.bf16.msra.mxu0 0
  %789 = vmatprep.subr.bf16.mxu0 0
  %790 = vmatpush1.bf16.msra.mxu0 0
  %791 = vmatprep.subr.bf16.mxu0 0
  %792 = vmatpush1.bf16.msra.mxu0 0
  %793 = vmatprep.subr.bf16.mxu0 0
  %794 = vmatpush1.bf16.msra.mxu0 0
  %795 = vmatprep.subr.bf16.mxu0 0
  %796 = vmatpush1.bf16.msra.mxu0 0
  %797 = vmatprep.subr.bf16.mxu0 0
  %798 = vmatpush1.bf16.msra.mxu0 0
  %799 = vmatprep.subr.bf16.mxu0 0
  %800 = vmatpush1.bf16.msra.mxu0 0
  %801 = vmatprep.subr.bf16.mxu0 0
  %802 = vmatpush1.bf16.msra.mxu0 0
  %803 = vmatprep.subr.bf16.mxu0 0
  %804 = vmatpush1.bf16.msra.mxu0 0
  %805 = vmatprep.subr.bf16.mxu0 0
  %806 = vmatpush1.bf16.msra.mxu0 0
  %807 = vmatprep.subr.bf16.mxu0 0
  %808 = vmatpush1.bf16.msra.mxu0 0
  %809 = vmatprep.subr.bf16.mxu0 0
  %810 = vmatpush1.bf16.msra.mxu0 0
  %811 = vmatprep.mubr.bf16.mxu0 0
  %812 = vmatmul.mubr.bf16.gmra.mrb[0].mxu0 %v110
  %v813 = vpop.f32.mrb[0].mxu0
  %v814 = vadd.f32 0.0, %v813
  %v815 = vpop.f32.mrb[0].mxu0
  %v816 = vpop.f32.mrb[0].mxu0
  %v817 = vadd.f32 0.0, %v816
  %v818 = vpop.f32.mrb[0].mxu0
  %819 = vmatprep.mubr.bf16.mxu0 0
  %820 = vmatmul.mubr.bf16.gmra.mrb[0].mxu0 %v113
  %v821 = vpop.f32.mrb[0].mxu0
  %v822 = vadd.f32 0.0, %v821
  %v823 = vpop.f32.mrb[0].mxu0
  %v824 = vpop.f32.mrb[0].mxu0
  %v825 = vadd.f32 0.0, %v824
  %v826 = vpop.f32.mrb[0].mxu0
  %827 = vmatprep.mubr.bf16.mxu0 0
  %828 = vmatmul.mubr.bf16.gmra.mrb[0].mxu0 %v116
  %v829 = vpop.f32.mrb[0].mxu0
  %v830 = vadd.f32 0.0, %v829
  %v831 = vpop.f32.mrb[0].mxu0
  %v832 = vpop.f32.mrb[0].mxu0
  %v833 = vadd.f32 0.0, %v832
  %v834 = vpop.f32.mrb[0].mxu0
  %835 = vmatprep.mubr.bf16.mxu0 0
  %836 = vmatmul.mubr.bf16.gmra.mrb[0].mxu0 %v119
  %v837 = vpop.f32.mrb[0].mxu0
  %v838 = vadd.f32 0.0, %v837
  %v839 = vpop.f32.mrb[0].mxu0
  %v840 = vpop.f32.mrb[0].mxu0
  %v841 = vadd.f32 0.0, %v840
  %v842 = vpop.f32.mrb[0].mxu0
  %843 = vdwg.mxu0
  %v844 = vpack.c.bf16 %v817, %v814
  %v845 = vpack.c.bf16 %v825, %v822
  %v846 = vpack.c.bf16 %v833, %v830
  %v847 = vpack.c.bf16 %v841, %v838
  %v848 = vlaneseq
  %v849 = vshrl.u32 %v848, 7
  %v850 = vsub.s32 0, %v849
  %v851 = vrot.slane %v768, %v850
  %v860 = vunpack.c.l.b16 %v760
  %v861 = vunpack.c.l.b16 %v761
  %v862 = vunpack.c.l.b16 %v762
  %v863 = vunpack.c.l.b16 %v763
  %v864 = vunpack.c.l.b16 %v764
  %v865 = vunpack.c.l.b16 %v765
  %v866 = vunpack.c.l.b16 %v766
  %v867 = vunpack.c.l.b16 %v767
  %v868 = vpack.c.b16 %v861, %v860
  %v869 = vpack.c.b16 %v863, %v862
  %v870 = vpack.c.b16 %v865, %v864
  %v871 = vpack.c.b16 %v867, %v866
  %v877 = vsel %vm108, %v844, 0
  %v880 = vsel %vm108, %v845, 0
  %v883 = vsel %vm108, %v846, 0
  %v886 = vsel %vm108, %v847, 0
  %888 = vmatprep.subr.bf16.mxu0 0
  %889 = vmatpush1.bf16.msra.mxu0 %v868
  %890 = vmatprep.subr.bf16.mxu0 0
  %891 = vmatpush1.bf16.msra.mxu0 %v869
  %892 = vmatprep.subr.bf16.mxu0 0
  %893 = vmatpush1.bf16.msra.mxu0 %v870
  %894 = vmatprep.subr.bf16.mxu0 0
  %895 = vmatpush1.bf16.msra.mxu0 %v871
  %896 = vmatprep.subr.bf16.mxu0 0
  %897 = vmatpush1.bf16.msra.mxu0 0
  %898 = vmatprep.subr.bf16.mxu0 0
  %899 = vmatpush1.bf16.msra.mxu0 0
  %900 = vmatprep.subr.bf16.mxu0 0
  %901 = vmatpush1.bf16.msra.mxu0 0
  %902 = vmatprep.subr.bf16.mxu0 0
  %903 = vmatpush1.bf16.msra.mxu0 0
  %904 = vmatprep.subr.bf16.mxu0 0
  %905 = vmatpush1.bf16.msra.mxu0 0
  %906 = vmatprep.subr.bf16.mxu0 0
  %907 = vmatpush1.bf16.msra.mxu0 0
  %908 = vmatprep.subr.bf16.mxu0 0
  %909 = vmatpush1.bf16.msra.mxu0 0
  %910 = vmatprep.subr.bf16.mxu0 0
  %911 = vmatpush1.bf16.msra.mxu0 0
  %912 = vmatprep.subr.bf16.mxu0 0
  %913 = vmatpush1.bf16.msra.mxu0 0
  %914 = vmatprep.subr.bf16.mxu0 0
  %915 = vmatpush1.bf16.msra.mxu0 0
  %916 = vmatprep.subr.bf16.mxu0 0
  %917 = vmatpush1.bf16.msra.mxu0 0
  %918 = vmatprep.subr.bf16.mxu0 0
  %919 = vmatpush1.bf16.msra.mxu0 0
  %920 = vmatprep.mubr.bf16.mxu0 0
  %921 = vmatmul.mubr.bf16.gmra.mrb[0].mxu0 %v877
  %v922 = vpop.f32.mrb[0].mxu0
  %v923 = vadd.f32 %v851, %v922
  %v924 = vpop.f32.mrb[0].mxu0
  %v925 = vpop.f32.mrb[0].mxu0
  %v926 = vadd.f32 %v851, %v925
  %v927 = vpop.f32.mrb[0].mxu0
  %928 = vmatprep.mubr.bf16.mxu0 0
  %929 = vmatmul.mubr.bf16.gmra.mrb[0].mxu0 %v880
  %v930 = vpop.f32.mrb[0].mxu0
  %v931 = vadd.f32 %v851, %v930
  %v932 = vpop.f32.mrb[0].mxu0
  %v933 = vpop.f32.mrb[0].mxu0
  %v934 = vadd.f32 %v851, %v933
  %v935 = vpop.f32.mrb[0].mxu0
  %936 = vmatprep.mubr.bf16.mxu0 0
  %937 = vmatmul.mubr.bf16.gmra.mrb[0].mxu0 %v883
  %v938 = vpop.f32.mrb[0].mxu0
  %v939 = vadd.f32 %v851, %v938
  %v940 = vpop.f32.mrb[0].mxu0
  %v941 = vpop.f32.mrb[0].mxu0
  %v942 = vadd.f32 %v851, %v941
  %v943 = vpop.f32.mrb[0].mxu0
  %944 = vmatprep.mubr.bf16.mxu0 0
  %945 = vmatmul.mubr.bf16.gmra.mrb[0].mxu0 %v886
  %v946 = vpop.f32.mrb[0].mxu0
  %v947 = vadd.f32 %v851, %v946
  %v948 = vpop.f32.mrb[0].mxu0
  %v949 = vpop.f32.mrb[0].mxu0
  %v950 = vadd.f32 %v851, %v949
  %v951 = vpop.f32.mrb[0].mxu0
  %952 = vdwg.mxu0
  %v953 = vmax.f32 %v923, 0.0
  %v954 = vmax.f32 %v926, 0.0
  %v955 = vmax.f32 %v931, 0.0
  %v956 = vmax.f32 %v934, 0.0
  %v957 = vmax.f32 %v939, 0.0
  %v958 = vmax.f32 %v942, 0.0
  %v959 = vmax.f32 %v947, 0.0
  %v960 = vmax.f32 %v950, 0.0
  %v961 = vpack.c.bf16 %v954, %v953
  %v962 = vpack.c.bf16 %v956, %v955
  %v963 = vpack.c.bf16 %v958, %v957
  %v964 = vpack.c.bf16 %v960, %v959
  %v965 = vlaneseq
  %v966 = vshrl.u32 %v965, 7
  %v967 = vsub.s32 0, %v966
  %v968 = vrot.slane %v778, %v967
  %v977 = vunpack.c.l.b16 %v770
  %v978 = vunpack.c.l.b16 %v771
  %v979 = vunpack.c.l.b16 %v772
  %v980 = vunpack.c.l.b16 %v773
  %v981 = vunpack.c.l.b16 %v774
  %v982 = vunpack.c.l.b16 %v775
  %v983 = vunpack.c.l.b16 %v776
  %v984 = vunpack.c.l.b16 %v777
  %v985 = vpack.c.b16 %v978, %v977
  %v986 = vpack.c.b16 %v980, %v979
  %v987 = vpack.c.b16 %v982, %v981
  %v988 = vpack.c.b16 %v984, %v983
  %v994 = vsel %vm108, %v961, 0
  %v997 = vsel %vm108, %v962, 0
  %v1000 = vsel %vm108, %v963, 0
  %v1003 = vsel %vm108, %v964, 0
  %1005 = vmatprep.subr.bf16.mxu0 0
  %1006 = vmatpush1.bf16.msra.mxu0 %v985
  %1007 = vmatprep.subr.bf16.mxu0 0
  %1008 = vmatpush1.bf16.msra.mxu0 %v986
  %1009 = vmatprep.subr.bf16.mxu0 0
  %1010 = vmatpush1.bf16.msra.mxu0 %v987
  %1011 = vmatprep.subr.bf16.mxu0 0
  %1012 = vmatpush1.bf16.msra.mxu0 %v988
  %1013 = vmatprep.subr.bf16.mxu0 0
  %1014 = vmatpush1.bf16.msra.mxu0 0
  %1015 = vmatprep.subr.bf16.mxu0 0
  %1016 = vmatpush1.bf16.msra.mxu0 0
  %1017 = vmatprep.subr.bf16.mxu0 0
  %1018 = vmatpush1.bf16.msra.mxu0 0
  %1019 = vmatprep.subr.bf16.mxu0 0
  %1020 = vmatpush1.bf16.msra.mxu0 0
  %1021 = vmatprep.subr.bf16.mxu0 0
  %1022 = vmatpush1.bf16.msra.mxu0 0
  %1023 = vmatprep.subr.bf16.mxu0 0
  %1024 = vmatpush1.bf16.msra.mxu0 0
  %1025 = vmatprep.subr.bf16.mxu0 0
  %1026 = vmatpush1.bf16.msra.mxu0 0
  %1027 = vmatprep.subr.bf16.mxu0 0
  %1028 = vmatpush1.bf16.msra.mxu0 0
  %1029 = vmatprep.subr.bf16.mxu0 0
  %1030 = vmatpush1.bf16.msra.mxu0 0
  %1031 = vmatprep.subr.bf16.mxu0 0
  %1032 = vmatpush1.bf16.msra.mxu0 0
  %1033 = vmatprep.subr.bf16.mxu0 0
  %1034 = vmatpush1.bf16.msra.mxu0 0
  %1035 = vmatprep.subr.bf16.mxu0 0
  %1036 = vmatpush1.bf16.msra.mxu0 0
  %1037 = vmatprep.mubr.bf16.mxu0 0
  %1038 = vmatmul.mubr.bf16.gmra.mrb[0].mxu0 %v994
  %v1039 = vpop.f32.mrb[0].mxu0
  %v1040 = vadd.f32 %v968, %v1039
  %v1041 = vpop.f32.mrb[0].mxu0
  %v1042 = vpop.f32.mrb[0].mxu0
  %v1043 = vadd.f32 %v968, %v1042
  %v1044 = vpop.f32.mrb[0].mxu0
  %1045 = vmatprep.mubr.bf16.mxu0 0
  %1046 = vmatmul.mubr.bf16.gmra.mrb[0].mxu0 %v997
  %v1047 = vpop.f32.mrb[0].mxu0
  %v1048 = vadd.f32 %v968, %v1047
  %v1049 = vpop.f32.mrb[0].mxu0
  %v1050 = vpop.f32.mrb[0].mxu0
  %v1051 = vadd.f32 %v968, %v1050
  %v1052 = vpop.f32.mrb[0].mxu0
  %1053 = vmatprep.mubr.bf16.mxu0 0
  %1054 = vmatmul.mubr.bf16.gmra.mrb[0].mxu0 %v1000
  %v1055 = vpop.f32.mrb[0].mxu0
  %v1056 = vadd.f32 %v968, %v1055
  %v1057 = vpop.f32.mrb[0].mxu0
  %v1058 = vpop.f32.mrb[0].mxu0
  %v1059 = vadd.f32 %v968, %v1058
  %v1060 = vpop.f32.mrb[0].mxu0
  %1061 = vmatprep.mubr.bf16.mxu0 0
  %1062 = vmatmul.mubr.bf16.gmra.mrb[0].mxu0 %v1003
  %v1063 = vpop.f32.mrb[0].mxu0
  %v1064 = vadd.f32 %v968, %v1063
  %v1065 = vpop.f32.mrb[0].mxu0
  %v1066 = vpop.f32.mrb[0].mxu0
  %v1067 = vadd.f32 %v968, %v1066
  %v1068 = vpop.f32.mrb[0].mxu0
  %1069 = vdwg.mxu0
  %v1070 = vmax.f32 %v1040, 0.0
  %v1071 = vmax.f32 %v1043, 0.0
  %v1072 = vmax.f32 %v1048, 0.0
  %v1073 = vmax.f32 %v1051, 0.0
  %v1074 = vmax.f32 %v1056, 0.0
  %v1075 = vmax.f32 %v1059, 0.0
  %v1076 = vmax.f32 %v1064, 0.0
  %v1077 = vmax.f32 %v1067, 0.0
  %v1078 = vpack.c.bf16 %v1071, %v1070
  %v1079 = vpack.c.bf16 %v1073, %v1072
  %v1080 = vpack.c.bf16 %v1075, %v1074
  %v1081 = vpack.c.bf16 %v1077, %v1076
  %s1082 = scalar_lea.vmem %s3, 384
  %v1083 = vld [vmem:[%s1082] sm:$0xf]
  %v1084 = vld [vmem:[%s1082 + $0x4] sm:$0xf]
  %v1085 = vld [vmem:[%s1082 + $0x8] sm:$0xf]
  %v1086 = vld [vmem:[%s1082 + $0xc] sm:$0xf]
  %v1087 = vld [vmem:[%s1082 + $0x10] sm:$0xf]
  %v1088 = vld [vmem:[%s1082 + $0x14] sm:$0xf]
  %v1089 = vld [vmem:[%s1082 + $0x18] sm:$0xf]
  %v1090 = vld [vmem:[%s1082 + $0x1c] sm:$0xf]
  %v1091 = vld [vmem:[%s4 + $0x6] sm:$0x1]
  %s1092 = scalar_lea.vmem %s3, 448
  %v1093 = vld [vmem:[%s1092] sm:$0xf]
  %v1094 = vld [vmem:[%s1092 + $0x4] sm:$0xf]
  %v1095 = vld [vmem:[%s1092 + $0x8] sm:$0xf]
  %v1096 = vld [vmem:[%s1092 + $0xc] sm:$0xf]
  %v1097 = vld [vmem:[%s1092 + $0x10] sm:$0xf]
  %v1098 = vld [vmem:[%s1092 + $0x14] sm:$0xf]
  %v1099 = vld [vmem:[%s1092 + $0x18] sm:$0xf]
  %v1100 = vld [vmem:[%s1092 + $0x1c] sm:$0xf]
  %v1101 = vld [vmem:[%s4 + $0x7] sm:$0x1]
  %1102 = vmatprep.subr.bf16.mxu0 0
  %1103 = vmatpush1.bf16.msra.mxu0 %v1078
  %1104 = vmatprep.subr.bf16.mxu0 0
  %1105 = vmatpush1.bf16.msra.mxu0 %v1079
  %1106 = vmatprep.subr.bf16.mxu0 0
  %1107 = vmatpush1.bf16.msra.mxu0 %v1080
  %1108 = vmatprep.subr.bf16.mxu0 0
  %1109 = vmatpush1.bf16.msra.mxu0 %v1081
  %1110 = vmatprep.subr.bf16.mxu0 0
  %1111 = vmatpush1.bf16.msra.mxu0 0
  %1112 = vmatprep.subr.bf16.mxu0 0
  %1113 = vmatpush1.bf16.msra.mxu0 0
  %1114 = vmatprep.subr.bf16.mxu0 0
  %1115 = vmatpush1.bf16.msra.mxu0 0
  %1116 = vmatprep.subr.bf16.mxu0 0
  %1117 = vmatpush1.bf16.msra.mxu0 0
  %1118 = vmatprep.subr.bf16.mxu0 0
  %1119 = vmatpush1.bf16.msra.mxu0 0
  %1120 = vmatprep.subr.bf16.mxu0 0
  %1121 = vmatpush1.bf16.msra.mxu0 0
  %1122 = vmatprep.subr.bf16.mxu0 0
  %1123 = vmatpush1.bf16.msra.mxu0 0
  %1124 = vmatprep.subr.bf16.mxu0 0
  %1125 = vmatpush1.bf16.msra.mxu0 0
  %1126 = vmatprep.subr.bf16.mxu0 0
  %1127 = vmatpush1.bf16.msra.mxu0 0
  %1128 = vmatprep.subr.bf16.mxu0 0
  %1129 = vmatpush1.bf16.msra.mxu0 0
  %1130 = vmatprep.subr.bf16.mxu0 0
  %1131 = vmatpush1.bf16.msra.mxu0 0
  %1132 = vmatprep.subr.bf16.mxu0 0
  %1133 = vmatpush1.bf16.msra.mxu0 0
  %1134 = vmatprep.mubr.bf16.mxu0 0
  %1135 = vmatmul.mubr.bf16.gmra.mrb[0].mxu0 %v110
  %v1136 = vpop.f32.mrb[0].mxu0
  %v1137 = vadd.f32 0.0, %v1136
  %v1138 = vpop.f32.mrb[0].mxu0
  %v1139 = vpop.f32.mrb[0].mxu0
  %v1140 = vadd.f32 0.0, %v1139
  %v1141 = vpop.f32.mrb[0].mxu0
  %1142 = vmatprep.mubr.bf16.mxu0 0
  %1143 = vmatmul.mubr.bf16.gmra.mrb[0].mxu0 %v113
  %v1144 = vpop.f32.mrb[0].mxu0
  %v1145 = vadd.f32 0.0, %v1144
  %v1146 = vpop.f32.mrb[0].mxu0
  %v1147 = vpop.f32.mrb[0].mxu0
  %v1148 = vadd.f32 0.0, %v1147
  %v1149 = vpop.f32.mrb[0].mxu0
  %1150 = vmatprep.mubr.bf16.mxu0 0
  %1151 = vmatmul.mubr.bf16.gmra.mrb[0].mxu0 %v116
  %v1152 = vpop.f32.mrb[0].mxu0
  %v1153 = vadd.f32 0.0, %v1152
  %v1154 = vpop.f32.mrb[0].mxu0
  %v1155 = vpop.f32.mrb[0].mxu0
  %v1156 = vadd.f32 0.0, %v1155
  %v1157 = vpop.f32.mrb[0].mxu0
  %1158 = vmatprep.mubr.bf16.mxu0 0
  %1159 = vmatmul.mubr.bf16.gmra.mrb[0].mxu0 %v119
  %v1160 = vpop.f32.mrb[0].mxu0
  %v1161 = vadd.f32 0.0, %v1160
  %v1162 = vpop.f32.mrb[0].mxu0
  %v1163 = vpop.f32.mrb[0].mxu0
  %v1164 = vadd.f32 0.0, %v1163
  %v1165 = vpop.f32.mrb[0].mxu0
  %1166 = vdwg.mxu0
  %v1167 = vpack.c.bf16 %v1140, %v1137
  %v1168 = vpack.c.bf16 %v1148, %v1145
  %v1169 = vpack.c.bf16 %v1156, %v1153
  %v1170 = vpack.c.bf16 %v1164, %v1161
  %v1171 = vlaneseq
  %v1172 = vshrl.u32 %v1171, 7
  %v1173 = vsub.s32 0, %v1172
  %v1174 = vrot.slane %v1091, %v1173
  %v1183 = vunpack.c.l.b16 %v1083
  %v1184 = vunpack.c.l.b16 %v1084
  %v1185 = vunpack.c.l.b16 %v1085
  %v1186 = vunpack.c.l.b16 %v1086
  %v1187 = vunpack.c.l.b16 %v1087
  %v1188 = vunpack.c.l.b16 %v1088
  %v1189 = vunpack.c.l.b16 %v1089
  %v1190 = vunpack.c.l.b16 %v1090
  %v1191 = vpack.c.b16 %v1184, %v1183
  %v1192 = vpack.c.b16 %v1186, %v1185
  %v1193 = vpack.c.b16 %v1188, %v1187
  %v1194 = vpack.c.b16 %v1190, %v1189
  %v1200 = vsel %vm108, %v1167, 0
  %v1203 = vsel %vm108, %v1168, 0
  %v1206 = vsel %vm108, %v1169, 0
  %v1209 = vsel %vm108, %v1170, 0
  %1211 = vmatprep.subr.bf16.mxu0 0
  %1212 = vmatpush1.bf16.msra.mxu0 %v1191
  %1213 = vmatprep.subr.bf16.mxu0 0
  %1214 = vmatpush1.bf16.msra.mxu0 %v1192
  %1215 = vmatprep.subr.bf16.mxu0 0
  %1216 = vmatpush1.bf16.msra.mxu0 %v1193
  %1217 = vmatprep.subr.bf16.mxu0 0
  %1218 = vmatpush1.bf16.msra.mxu0 %v1194
  %1219 = vmatprep.subr.bf16.mxu0 0
  %1220 = vmatpush1.bf16.msra.mxu0 0
  %1221 = vmatprep.subr.bf16.mxu0 0
  %1222 = vmatpush1.bf16.msra.mxu0 0
  %1223 = vmatprep.subr.bf16.mxu0 0
  %1224 = vmatpush1.bf16.msra.mxu0 0
  %1225 = vmatprep.subr.bf16.mxu0 0
  %1226 = vmatpush1.bf16.msra.mxu0 0
  %1227 = vmatprep.subr.bf16.mxu0 0
  %1228 = vmatpush1.bf16.msra.mxu0 0
  %1229 = vmatprep.subr.bf16.mxu0 0
  %1230 = vmatpush1.bf16.msra.mxu0 0
  %1231 = vmatprep.subr.bf16.mxu0 0
  %1232 = vmatpush1.bf16.msra.mxu0 0
  %1233 = vmatprep.subr.bf16.mxu0 0
  %1234 = vmatpush1.bf16.msra.mxu0 0
  %1235 = vmatprep.subr.bf16.mxu0 0
  %1236 = vmatpush1.bf16.msra.mxu0 0
  %1237 = vmatprep.subr.bf16.mxu0 0
  %1238 = vmatpush1.bf16.msra.mxu0 0
  %1239 = vmatprep.subr.bf16.mxu0 0
  %1240 = vmatpush1.bf16.msra.mxu0 0
  %1241 = vmatprep.subr.bf16.mxu0 0
  %1242 = vmatpush1.bf16.msra.mxu0 0
  %1243 = vmatprep.mubr.bf16.mxu0 0
  %1244 = vmatmul.mubr.bf16.gmra.mrb[0].mxu0 %v1200
  %v1245 = vpop.f32.mrb[0].mxu0
  %v1246 = vadd.f32 %v1174, %v1245
  %v1247 = vpop.f32.mrb[0].mxu0
  %v1248 = vpop.f32.mrb[0].mxu0
  %v1249 = vadd.f32 %v1174, %v1248
  %v1250 = vpop.f32.mrb[0].mxu0
  %1251 = vmatprep.mubr.bf16.mxu0 0
  %1252 = vmatmul.mubr.bf16.gmra.mrb[0].mxu0 %v1203
  %v1253 = vpop.f32.mrb[0].mxu0
  %v1254 = vadd.f32 %v1174, %v1253
  %v1255 = vpop.f32.mrb[0].mxu0
  %v1256 = vpop.f32.mrb[0].mxu0
  %v1257 = vadd.f32 %v1174, %v1256
  %v1258 = vpop.f32.mrb[0].mxu0
  %1259 = vmatprep.mubr.bf16.mxu0 0
  %1260 = vmatmul.mubr.bf16.gmra.mrb[0].mxu0 %v1206
  %v1261 = vpop.f32.mrb[0].mxu0
  %v1262 = vadd.f32 %v1174, %v1261
  %v1263 = vpop.f32.mrb[0].mxu0
  %v1264 = vpop.f32.mrb[0].mxu0
  %v1265 = vadd.f32 %v1174, %v1264
  %v1266 = vpop.f32.mrb[0].mxu0
  %1267 = vmatprep.mubr.bf16.mxu0 0
  %1268 = vmatmul.mubr.bf16.gmra.mrb[0].mxu0 %v1209
  %v1269 = vpop.f32.mrb[0].mxu0
  %v1270 = vadd.f32 %v1174, %v1269
  %v1271 = vpop.f32.mrb[0].mxu0
  %v1272 = vpop.f32.mrb[0].mxu0
  %v1273 = vadd.f32 %v1174, %v1272
  %v1274 = vpop.f32.mrb[0].mxu0
  %1275 = vdwg.mxu0
  %v1276 = vmax.f32 %v1246, 0.0
  %v1277 = vmax.f32 %v1249, 0.0
  %v1278 = vmax.f32 %v1254, 0.0
  %v1279 = vmax.f32 %v1257, 0.0
  %v1280 = vmax.f32 %v1262, 0.0
  %v1281 = vmax.f32 %v1265, 0.0
  %v1282 = vmax.f32 %v1270, 0.0
  %v1283 = vmax.f32 %v1273, 0.0
  %v1284 = vpack.c.bf16 %v1277, %v1276
  %v1285 = vpack.c.bf16 %v1279, %v1278
  %v1286 = vpack.c.bf16 %v1281, %v1280
  %v1287 = vpack.c.bf16 %v1283, %v1282
  %v1288 = vlaneseq
  %v1289 = vshrl.u32 %v1288, 7
  %v1290 = vsub.s32 0, %v1289
  %v1291 = vrot.slane %v1101, %v1290
  %v1300 = vunpack.c.l.b16 %v1093
  %v1301 = vunpack.c.l.b16 %v1094
  %v1302 = vunpack.c.l.b16 %v1095
  %v1303 = vunpack.c.l.b16 %v1096
  %v1304 = vunpack.c.l.b16 %v1097
  %v1305 = vunpack.c.l.b16 %v1098
  %v1306 = vunpack.c.l.b16 %v1099
  %v1307 = vunpack.c.l.b16 %v1100
  %v1308 = vpack.c.b16 %v1301, %v1300
  %v1309 = vpack.c.b16 %v1303, %v1302
  %v1310 = vpack.c.b16 %v1305, %v1304
  %v1311 = vpack.c.b16 %v1307, %v1306
  %v1317 = vsel %vm108, %v1284, 0
  %v1320 = vsel %vm108, %v1285, 0
  %v1323 = vsel %vm108, %v1286, 0
  %v1326 = vsel %vm108, %v1287, 0
  %1328 = vmatprep.subr.bf16.mxu0 0
  %1329 = vmatpush1.bf16.msra.mxu0 %v1308
  %1330 = vmatprep.subr.bf16.mxu0 0
  %1331 = vmatpush1.bf16.msra.mxu0 %v1309
  %1332 = vmatprep.subr.bf16.mxu0 0
  %1333 = vmatpush1.bf16.msra.mxu0 %v1310
  %1334 = vmatprep.subr.bf16.mxu0 0
  %1335 = vmatpush1.bf16.msra.mxu0 %v1311
  %1336 = vmatprep.subr.bf16.mxu0 0
  %1337 = vmatpush1.bf16.msra.mxu0 0
  %1338 = vmatprep.subr.bf16.mxu0 0
  %1339 = vmatpush1.bf16.msra.mxu0 0
  %1340 = vmatprep.subr.bf16.mxu0 0
  %1341 = vmatpush1.bf16.msra.mxu0 0
  %1342 = vmatprep.subr.bf16.mxu0 0
  %1343 = vmatpush1.bf16.msra.mxu0 0
  %1344 = vmatprep.subr.bf16.mxu0 0
  %1345 = vmatpush1.bf16.msra.mxu0 0
  %1346 = vmatprep.subr.bf16.mxu0 0
  %1347 = vmatpush1.bf16.msra.mxu0 0
  %1348 = vmatprep.subr.bf16.mxu0 0
  %1349 = vmatpush1.bf16.msra.mxu0 0
  %1350 = vmatprep.subr.bf16.mxu0 0
  %1351 = vmatpush1.bf16.msra.mxu0 0
  %1352 = vmatprep.subr.bf16.mxu0 0
  %1353 = vmatpush1.bf16.msra.mxu0 0
  %1354 = vmatprep.subr.bf16.mxu0 0
  %1355 = vmatpush1.bf16.msra.mxu0 0
  %1356 = vmatprep.subr.bf16.mxu0 0
  %1357 = vmatpush1.bf16.msra.mxu0 0
  %1358 = vmatprep.subr.bf16.mxu0 0
  %1359 = vmatpush1.bf16.msra.mxu0 0
  %1360 = vmatprep.mubr.bf16.mxu0 0
  %1361 = vmatmul.mubr.bf16.gmra.mrb[0].mxu0 %v1317
  %v1362 = vpop.f32.mrb[0].mxu0
  %v1363 = vadd.f32 %v1291, %v1362
  %v1364 = vpop.f32.mrb[0].mxu0
  %v1365 = vpop.f32.mrb[0].mxu0
  %v1366 = vadd.f32 %v1291, %v1365
  %v1367 = vpop.f32.mrb[0].mxu0
  %1368 = vmatprep.mubr.bf16.mxu0 0
  %1369 = vmatmul.mubr.bf16.gmra.mrb[0].mxu0 %v1320
  %v1370 = vpop.f32.mrb[0].mxu0
  %v1371 = vadd.f32 %v1291, %v1370
  %v1372 = vpop.f32.mrb[0].mxu0
  %v1373 = vpop.f32.mrb[0].mxu0
  %v1374 = vadd.f32 %v1291, %v1373
  %v1375 = vpop.f32.mrb[0].mxu0
  %1376 = vmatprep.mubr.bf16.mxu0 0
  %1377 = vmatmul.mubr.bf16.gmra.mrb[0].mxu0 %v1323
  %v1378 = vpop.f32.mrb[0].mxu0
  %v1379 = vadd.f32 %v1291, %v1378
  %v1380 = vpop.f32.mrb[0].mxu0
  %v1381 = vpop.f32.mrb[0].mxu0
  %v1382 = vadd.f32 %v1291, %v1381
  %v1383 = vpop.f32.mrb[0].mxu0
  %1384 = vmatprep.mubr.bf16.mxu0 0
  %1385 = vmatmul.mubr.bf16.gmra.mrb[0].mxu0 %v1326
  %v1386 = vpop.f32.mrb[0].mxu0
  %v1387 = vadd.f32 %v1291, %v1386
  %v1388 = vpop.f32.mrb[0].mxu0
  %v1389 = vpop.f32.mrb[0].mxu0
  %v1390 = vadd.f32 %v1291, %v1389
  %v1391 = vpop.f32.mrb[0].mxu0
  %1392 = vdwg.mxu0
  %v1393 = vld [vmem:[%s2] sm:$0xff]
  %v1394 = vld [vmem:[%s2 + $0x8] sm:$0xff]
  %v1395 = vld [vmem:[%s2 + $0x10] sm:$0xff]
  %v1396 = vld [vmem:[%s2 + $0x18] sm:$0xff]
  %v1397 = vld [vmem:[%s2 + $0x20] sm:$0xff]
  %v1398 = vld [vmem:[%s2 + $0x28] sm:$0xff]
  %v1399 = vld [vmem:[%s2 + $0x30] sm:$0xff]
  %v1400 = vld [vmem:[%s2 + $0x38] sm:$0xff]
  %1402 = vset.pattern.permute.xlu0 0
  %1403 = vperm.xlu0 %1402, %v1393
  %v1404 = vpop.permute.xlu0 %1403
  %1407 = vset.pattern.permute.xlu0 0
  %1408 = vperm.xlu0 %1407, %v1394
  %v1409 = vpop.permute.xlu0 %1408
  %1412 = vset.pattern.permute.xlu0 0
  %1413 = vperm.xlu0 %1412, %v1395
  %v1414 = vpop.permute.xlu0 %1413
  %1417 = vset.pattern.permute.xlu0 0
  %1418 = vperm.xlu0 %1417, %v1396
  %v1419 = vpop.permute.xlu0 %1418
  %1422 = vset.pattern.permute.xlu0 0
  %1423 = vperm.xlu0 %1422, %v1397
  %v1424 = vpop.permute.xlu0 %1423
  %1427 = vset.pattern.permute.xlu0 0
  %1428 = vperm.xlu0 %1427, %v1398
  %v1429 = vpop.permute.xlu0 %1428
  %1432 = vset.pattern.permute.xlu0 0
  %1433 = vperm.xlu0 %1432, %v1399
  %v1434 = vpop.permute.xlu0 %1433
  %1437 = vset.pattern.permute.xlu0 0
  %1438 = vperm.xlu0 %1437, %v1400
  %v1439 = vpop.permute.xlu0 %1438
  %v1441 = vmul.f32 %v1363, %v1404
  %v1442 = vmul.f32 %v1366, %v1409
  %v1443 = vmul.f32 %v1371, %v1414
  %v1444 = vmul.f32 %v1374, %v1419
  %v1445 = vmul.f32 %v1379, %v1424
  %v1446 = vmul.f32 %v1382, %v1429
  %v1447 = vmul.f32 %v1387, %v1434
  %v1448 = vmul.f32 %v1390, %v1439
  %v1449 = vpack.c.bf16 %v1442, %v1441
  %v1450 = vpack.c.bf16 %v1444, %v1443
  %v1451 = vpack.c.bf16 %v1446, %v1445
  %v1452 = vpack.c.bf16 %v1448, %v1447
  %s1453 = scalar_lea.vmem %s3, 512
  %v1454 = vld [vmem:[%s1453] sm:$0xf]
  %v1455 = vld [vmem:[%s1453 + $0x4] sm:$0xf]
  %v1456 = vld [vmem:[%s4 + $0x8] sm:$0x1]
  %s1457 = scalar_lea.vmem %s3, 576
  %v1458 = vld [vmem:[%s1457] sm:$0xf]
  %v1459 = vld [vmem:[%s1457 + $0x4] sm:$0xf]
  %v1460 = vld [vmem:[%s1457 + $0x8] sm:$0xf]
  %v1461 = vld [vmem:[%s1457 + $0xc] sm:$0xf]
  %v1462 = vld [vmem:[%s1457 + $0x10] sm:$0xf]
  %v1463 = vld [vmem:[%s1457 + $0x14] sm:$0xf]
  %v1464 = vld [vmem:[%s1457 + $0x18] sm:$0xf]
  %v1465 = vld [vmem:[%s1457 + $0x1c] sm:$0xf]
  %v1466 = vld [vmem:[%s4 + $0x9] sm:$0x1]
  %1467 = vmatprep.subr.bf16.mxu0 0
  %1468 = vmatpush1.bf16.msra.mxu0 %v1449
  %1469 = vmatprep.subr.bf16.mxu0 0
  %1470 = vmatpush1.bf16.msra.mxu0 %v1450
  %1471 = vmatprep.subr.bf16.mxu0 0
  %1472 = vmatpush1.bf16.msra.mxu0 %v1451
  %1473 = vmatprep.subr.bf16.mxu0 0
  %1474 = vmatpush1.bf16.msra.mxu0 %v1452
  %1475 = vmatprep.subr.bf16.mxu0 0
  %1476 = vmatpush1.bf16.msra.mxu0 0
  %1477 = vmatprep.subr.bf16.mxu0 0
  %1478 = vmatpush1.bf16.msra.mxu0 0
  %1479 = vmatprep.subr.bf16.mxu0 0
  %1480 = vmatpush1.bf16.msra.mxu0 0
  %1481 = vmatprep.subr.bf16.mxu0 0
  %1482 = vmatpush1.bf16.msra.mxu0 0
  %1483 = vmatprep.subr.bf16.mxu0 0
  %1484 = vmatpush1.bf16.msra.mxu0 0
  %1485 = vmatprep.subr.bf16.mxu0 0
  %1486 = vmatpush1.bf16.msra.mxu0 0
  %1487 = vmatprep.subr.bf16.mxu0 0
  %1488 = vmatpush1.bf16.msra.mxu0 0
  %1489 = vmatprep.subr.bf16.mxu0 0
  %1490 = vmatpush1.bf16.msra.mxu0 0
  %1491 = vmatprep.subr.bf16.mxu0 0
  %1492 = vmatpush1.bf16.msra.mxu0 0
  %1493 = vmatprep.subr.bf16.mxu0 0
  %1494 = vmatpush1.bf16.msra.mxu0 0
  %1495 = vmatprep.subr.bf16.mxu0 0
  %1496 = vmatpush1.bf16.msra.mxu0 0
  %1497 = vmatprep.subr.bf16.mxu0 0
  %1498 = vmatpush1.bf16.msra.mxu0 0
  %1499 = vmatprep.mubr.bf16.mxu0 0
  %1500 = vmatmul.mubr.bf16.gmra.mrb[0].mxu0 %v110
  %v1501 = vpop.f32.mrb[0].mxu0
  %v1502 = vadd.f32 0.0, %v1501
  %v1503 = vpop.f32.mrb[0].mxu0
  %v1504 = vpop.f32.mrb[0].mxu0
  %v1505 = vadd.f32 0.0, %v1504
  %v1506 = vpop.f32.mrb[0].mxu0
  %1507 = vmatprep.mubr.bf16.mxu0 0
  %1508 = vmatmul.mubr.bf16.gmra.mrb[0].mxu0 %v113
  %v1509 = vpop.f32.mrb[0].mxu0
  %v1510 = vadd.f32 0.0, %v1509
  %v1511 = vpop.f32.mrb[0].mxu0
  %v1512 = vpop.f32.mrb[0].mxu0
  %v1513 = vadd.f32 0.0, %v1512
  %v1514 = vpop.f32.mrb[0].mxu0
  %1515 = vmatprep.mubr.bf16.mxu0 0
  %1516 = vmatmul.mubr.bf16.gmra.mrb[0].mxu0 %v116
  %v1517 = vpop.f32.mrb[0].mxu0
  %v1518 = vadd.f32 0.0, %v1517
  %v1519 = vpop.f32.mrb[0].mxu0
  %v1520 = vpop.f32.mrb[0].mxu0
  %v1521 = vadd.f32 0.0, %v1520
  %v1522 = vpop.f32.mrb[0].mxu0
  %1523 = vmatprep.mubr.bf16.mxu0 0
  %1524 = vmatmul.mubr.bf16.gmra.mrb[0].mxu0 %v119
  %v1525 = vpop.f32.mrb[0].mxu0
  %v1526 = vadd.f32 0.0, %v1525
  %v1527 = vpop.f32.mrb[0].mxu0
  %v1528 = vpop.f32.mrb[0].mxu0
  %v1529 = vadd.f32 0.0, %v1528
  %v1530 = vpop.f32.mrb[0].mxu0
  %1531 = vdwg.mxu0
  %v1532 = vpack.c.bf16 %v1505, %v1502
  %v1533 = vpack.c.bf16 %v1513, %v1510
  %v1534 = vpack.c.bf16 %v1521, %v1518
  %v1535 = vpack.c.bf16 %v1529, %v1526
  %v1536 = vlaneseq
  %v1537 = vshrl.u32 %v1536, 7
  %v1538 = vsub.s32 0, %v1537
  %v1539 = vrot.slane %v1456, %v1538
  %v1542 = vunpack.c.l.b16 %v1454
  %v1543 = vunpack.c.l.b16 %v1455
  %v1544 = vpack.c.b16 %v1543, %v1542
  %vm1546 = vcmask 130048
  %v1548 = vsel %vm1546, %v1532, 0
  %v1551 = vsel %vm1546, %v1533, 0
  %v1554 = vsel %vm1546, %v1534, 0
  %v1557 = vsel %vm1546, %v1535, 0
  %1559 = vmatprep.subr.bf16.mxu0 0
  %1560 = vmatpush1.bf16.msra.mxu0 %v1544
  %1561 = vmatprep.subr.bf16.mxu0 0
  %1562 = vmatpush1.bf16.msra.mxu0 0
  %1563 = vmatprep.subr.bf16.mxu0 0
  %1564 = vmatpush1.bf16.msra.mxu0 0
  %1565 = vmatprep.subr.bf16.mxu0 0
  %1566 = vmatpush1.bf16.msra.mxu0 0
  %1567 = vmatprep.subr.bf16.mxu0 0
  %1568 = vmatpush1.bf16.msra.mxu0 0
  %1569 = vmatprep.subr.bf16.mxu0 0
  %1570 = vmatpush1.bf16.msra.mxu0 0
  %1571 = vmatprep.subr.bf16.mxu0 0
  %1572 = vmatpush1.bf16.msra.mxu0 0
  %1573 = vmatprep.subr.bf16.mxu0 0
  %1574 = vmatpush1.bf16.msra.mxu0 0
  %1575 = vmatprep.subr.bf16.mxu0 0
  %1576 = vmatpush1.bf16.msra.mxu0 0
  %1577 = vmatprep.subr.bf16.mxu0 0
  %1578 = vmatpush1.bf16.msra.mxu0 0
  %1579 = vmatprep.subr.bf16.mxu0 0
  %1580 = vmatpush1.bf16.msra.mxu0 0
  %1581 = vmatprep.subr.bf16.mxu0 0
  %1582 = vmatpush1.bf16.msra.mxu0 0
  %1583 = vmatprep.subr.bf16.mxu0 0
  %1584 = vmatpush1.bf16.msra.mxu0 0
  %1585 = vmatprep.subr.bf16.mxu0 0
  %1586 = vmatpush1.bf16.msra.mxu0 0
  %1587 = vmatprep.subr.bf16.mxu0 0
  %1588 = vmatpush1.bf16.msra.mxu0 0
  %1589 = vmatprep.subr.bf16.mxu0 0
  %1590 = vmatpush1.bf16.msra.mxu0 0
  %1591 = vmatprep.mubr.bf16.mxu0 0
  %1592 = vmatmul.mubr.bf16.gmra.mrb[0].mxu0 %v1548
  %v1593 = vpop.f32.mrb[0].mxu0
  %v1594 = vadd.f32 %v1539, %v1593
  %v1595 = vpop.f32.mrb[0].mxu0
  %v1596 = vpop.f32.mrb[0].mxu0
  %v1597 = vadd.f32 %v1539, %v1596
  %v1598 = vpop.f32.mrb[0].mxu0
  %1599 = vmatprep.mubr.bf16.mxu0 0
  %1600 = vmatmul.mubr.bf16.gmra.mrb[0].mxu0 %v1551
  %v1601 = vpop.f32.mrb[0].mxu0
  %v1602 = vadd.f32 %v1539, %v1601
  %v1603 = vpop.f32.mrb[0].mxu0
  %v1604 = vpop.f32.mrb[0].mxu0
  %v1605 = vadd.f32 %v1539, %v1604
  %v1606 = vpop.f32.mrb[0].mxu0
  %1607 = vmatprep.mubr.bf16.mxu0 0
  %1608 = vmatmul.mubr.bf16.gmra.mrb[0].mxu0 %v1554
  %v1609 = vpop.f32.mrb[0].mxu0
  %v1610 = vadd.f32 %v1539, %v1609
  %v1611 = vpop.f32.mrb[0].mxu0
  %v1612 = vpop.f32.mrb[0].mxu0
  %v1613 = vadd.f32 %v1539, %v1612
  %v1614 = vpop.f32.mrb[0].mxu0
  %1615 = vmatprep.mubr.bf16.mxu0 0
  %1616 = vmatmul.mubr.bf16.gmra.mrb[0].mxu0 %v1557
  %v1617 = vpop.f32.mrb[0].mxu0
  %v1618 = vadd.f32 %v1539, %v1617
  %v1619 = vpop.f32.mrb[0].mxu0
  %v1620 = vpop.f32.mrb[0].mxu0
  %v1621 = vadd.f32 %v1539, %v1620
  %v1622 = vpop.f32.mrb[0].mxu0
  %1623 = vdwg.mxu0
  %v1624 = vmax.f32 %v1594, 0.0
  %v1625 = vmax.f32 %v1597, 0.0
  %v1626 = vmax.f32 %v1602, 0.0
  %v1627 = vmax.f32 %v1605, 0.0
  %v1628 = vmax.f32 %v1610, 0.0
  %v1629 = vmax.f32 %v1613, 0.0
  %v1630 = vmax.f32 %v1618, 0.0
  %v1631 = vmax.f32 %v1621, 0.0
  %v1632 = vpack.c.bf16 %v1625, %v1624
  %v1633 = vpack.c.bf16 %v1627, %v1626
  %v1634 = vpack.c.bf16 %v1629, %v1628
  %v1635 = vpack.c.bf16 %v1631, %v1630
  %v1636 = vlaneseq
  %v1637 = vshrl.u32 %v1636, 7
  %v1638 = vsub.s32 0, %v1637
  %v1639 = vrot.slane %v1466, %v1638
  %v1648 = vunpack.c.l.b16 %v1458
  %v1649 = vunpack.c.l.b16 %v1459
  %v1650 = vunpack.c.l.b16 %v1460
  %v1651 = vunpack.c.l.b16 %v1461
  %v1652 = vunpack.c.l.b16 %v1462
  %v1653 = vunpack.c.l.b16 %v1463
  %v1654 = vunpack.c.l.b16 %v1464
  %v1655 = vunpack.c.l.b16 %v1465
  %v1656 = vpack.c.b16 %v1649, %v1648
  %v1657 = vpack.c.b16 %v1651, %v1650
  %v1658 = vpack.c.b16 %v1653, %v1652
  %v1659 = vpack.c.b16 %v1655, %v1654
  %v1665 = vsel %vm108, %v1632, 0
  %v1668 = vsel %vm108, %v1633, 0
  %v1671 = vsel %vm108, %v1634, 0
  %v1674 = vsel %vm108, %v1635, 0
  %1676 = vmatprep.subr.bf16.mxu0 0
  %1677 = vmatpush1.bf16.msra.mxu0 %v1656
  %1678 = vmatprep.subr.bf16.mxu0 0
  %1679 = vmatpush1.bf16.msra.mxu0 %v1657
  %1680 = vmatprep.subr.bf16.mxu0 0
  %1681 = vmatpush1.bf16.msra.mxu0 %v1658
  %1682 = vmatprep.subr.bf16.mxu0 0
  %1683 = vmatpush1.bf16.msra.mxu0 %v1659
  %1684 = vmatprep.subr.bf16.mxu0 0
  %1685 = vmatpush1.bf16.msra.mxu0 0
  %1686 = vmatprep.subr.bf16.mxu0 0
  %1687 = vmatpush1.bf16.msra.mxu0 0
  %1688 = vmatprep.subr.bf16.mxu0 0
  %1689 = vmatpush1.bf16.msra.mxu0 0
  %1690 = vmatprep.subr.bf16.mxu0 0
  %1691 = vmatpush1.bf16.msra.mxu0 0
  %1692 = vmatprep.subr.bf16.mxu0 0
  %1693 = vmatpush1.bf16.msra.mxu0 0
  %1694 = vmatprep.subr.bf16.mxu0 0
  %1695 = vmatpush1.bf16.msra.mxu0 0
  %1696 = vmatprep.subr.bf16.mxu0 0
  %1697 = vmatpush1.bf16.msra.mxu0 0
  %1698 = vmatprep.subr.bf16.mxu0 0
  %1699 = vmatpush1.bf16.msra.mxu0 0
  %1700 = vmatprep.subr.bf16.mxu0 0
  %1701 = vmatpush1.bf16.msra.mxu0 0
  %1702 = vmatprep.subr.bf16.mxu0 0
  %1703 = vmatpush1.bf16.msra.mxu0 0
  %1704 = vmatprep.subr.bf16.mxu0 0
  %1705 = vmatpush1.bf16.msra.mxu0 0
  %1706 = vmatprep.subr.bf16.mxu0 0
  %1707 = vmatpush1.bf16.msra.mxu0 0
  %1708 = vmatprep.mubr.bf16.mxu0 0
  %1709 = vmatmul.mubr.bf16.gmra.mrb[0].mxu0 %v1665
  %v1710 = vpop.f32.mrb[0].mxu0
  %v1711 = vadd.f32 %v1639, %v1710
  %v1712 = vpop.f32.mrb[0].mxu0
  %v1713 = vpop.f32.mrb[0].mxu0
  %v1714 = vadd.f32 %v1639, %v1713
  %v1715 = vpop.f32.mrb[0].mxu0
  %1716 = vmatprep.mubr.bf16.mxu0 0
  %1717 = vmatmul.mubr.bf16.gmra.mrb[0].mxu0 %v1668
  %v1718 = vpop.f32.mrb[0].mxu0
  %v1719 = vadd.f32 %v1639, %v1718
  %v1720 = vpop.f32.mrb[0].mxu0
  %v1721 = vpop.f32.mrb[0].mxu0
  %v1722 = vadd.f32 %v1639, %v1721
  %v1723 = vpop.f32.mrb[0].mxu0
  %1724 = vmatprep.mubr.bf16.mxu0 0
  %1725 = vmatmul.mubr.bf16.gmra.mrb[0].mxu0 %v1671
  %v1726 = vpop.f32.mrb[0].mxu0
  %v1727 = vadd.f32 %v1639, %v1726
  %v1728 = vpop.f32.mrb[0].mxu0
  %v1729 = vpop.f32.mrb[0].mxu0
  %v1730 = vadd.f32 %v1639, %v1729
  %v1731 = vpop.f32.mrb[0].mxu0
  %1732 = vmatprep.mubr.bf16.mxu0 0
  %1733 = vmatmul.mubr.bf16.gmra.mrb[0].mxu0 %v1674
  %v1734 = vpop.f32.mrb[0].mxu0
  %v1735 = vadd.f32 %v1639, %v1734
  %v1736 = vpop.f32.mrb[0].mxu0
  %v1737 = vpop.f32.mrb[0].mxu0
  %v1738 = vadd.f32 %v1639, %v1737
  %v1739 = vpop.f32.mrb[0].mxu0
  %1740 = vdwg.mxu0
  %v1741 = vmax.f32 %v1711, 0.0
  %v1742 = vmax.f32 %v1714, 0.0
  %v1743 = vmax.f32 %v1719, 0.0
  %v1744 = vmax.f32 %v1722, 0.0
  %v1745 = vmax.f32 %v1727, 0.0
  %v1746 = vmax.f32 %v1730, 0.0
  %v1747 = vmax.f32 %v1735, 0.0
  %v1748 = vmax.f32 %v1738, 0.0
  %v1749 = vpack.c.bf16 %v1742, %v1741
  %v1750 = vpack.c.bf16 %v1744, %v1743
  %v1751 = vpack.c.bf16 %v1746, %v1745
  %v1752 = vpack.c.bf16 %v1748, %v1747
  %s1753 = scalar_lea.vmem %s3, 640
  %v1754 = vld [vmem:[%s1753] sm:$0xf]
  %v1755 = vld [vmem:[%s1753 + $0x4] sm:$0xf]
  %v1756 = vld [vmem:[%s1753 + $0x8] sm:$0xf]
  %v1757 = vld [vmem:[%s1753 + $0xc] sm:$0xf]
  %v1758 = vld [vmem:[%s1753 + $0x10] sm:$0xf]
  %v1759 = vld [vmem:[%s1753 + $0x14] sm:$0xf]
  %v1760 = vld [vmem:[%s1753 + $0x18] sm:$0xf]
  %v1761 = vld [vmem:[%s1753 + $0x1c] sm:$0xf]
  %v1762 = vld [vmem:[%s4 + $0xa] sm:$0x1]
  %s1763 = scalar_lea.vmem %s3, 704
  %v1764 = vld [vmem:[%s1763] sm:$0xf]
  %v1765 = vld [vmem:[%s1763 + $0x4] sm:$0xf]
  %v1766 = vld [vmem:[%s1763 + $0x8] sm:$0xf]
  %v1767 = vld [vmem:[%s1763 + $0xc] sm:$0xf]
  %v1768 = vld [vmem:[%s1763 + $0x10] sm:$0xf]
  %v1769 = vld [vmem:[%s1763 + $0x14] sm:$0xf]
  %v1770 = vld [vmem:[%s1763 + $0x18] sm:$0xf]
  %v1771 = vld [vmem:[%s1763 + $0x1c] sm:$0xf]
  %v1772 = vld [vmem:[%s4 + $0xb] sm:$0x1]
  %1773 = vmatprep.subr.bf16.mxu0 0
  %1774 = vmatpush1.bf16.msra.mxu0 %v1749
  %1775 = vmatprep.subr.bf16.mxu0 0
  %1776 = vmatpush1.bf16.msra.mxu0 %v1750
  %1777 = vmatprep.subr.bf16.mxu0 0
  %1778 = vmatpush1.bf16.msra.mxu0 %v1751
  %1779 = vmatprep.subr.bf16.mxu0 0
  %1780 = vmatpush1.bf16.msra.mxu0 %v1752
  %1781 = vmatprep.subr.bf16.mxu0 0
  %1782 = vmatpush1.bf16.msra.mxu0 0
  %1783 = vmatprep.subr.bf16.mxu0 0
  %1784 = vmatpush1.bf16.msra.mxu0 0
  %1785 = vmatprep.subr.bf16.mxu0 0
  %1786 = vmatpush1.bf16.msra.mxu0 0
  %1787 = vmatprep.subr.bf16.mxu0 0
  %1788 = vmatpush1.bf16.msra.mxu0 0
  %1789 = vmatprep.subr.bf16.mxu0 0
  %1790 = vmatpush1.bf16.msra.mxu0 0
  %1791 = vmatprep.subr.bf16.mxu0 0
  %1792 = vmatpush1.bf16.msra.mxu0 0
  %1793 = vmatprep.subr.bf16.mxu0 0
  %1794 = vmatpush1.bf16.msra.mxu0 0
  %1795 = vmatprep.subr.bf16.mxu0 0
  %1796 = vmatpush1.bf16.msra.mxu0 0
  %1797 = vmatprep.subr.bf16.mxu0 0
  %1798 = vmatpush1.bf16.msra.mxu0 0
  %1799 = vmatprep.subr.bf16.mxu0 0
  %1800 = vmatpush1.bf16.msra.mxu0 0
  %1801 = vmatprep.subr.bf16.mxu0 0
  %1802 = vmatpush1.bf16.msra.mxu0 0
  %1803 = vmatprep.subr.bf16.mxu0 0
  %1804 = vmatpush1.bf16.msra.mxu0 0
  %1805 = vmatprep.mubr.bf16.mxu0 0
  %1806 = vmatmul.mubr.bf16.gmra.mrb[0].mxu0 %v110
  %v1807 = vpop.f32.mrb[0].mxu0
  %v1808 = vadd.f32 0.0, %v1807
  %v1809 = vpop.f32.mrb[0].mxu0
  %v1810 = vpop.f32.mrb[0].mxu0
  %v1811 = vadd.f32 0.0, %v1810
  %v1812 = vpop.f32.mrb[0].mxu0
  %1813 = vmatprep.mubr.bf16.mxu0 0
  %1814 = vmatmul.mubr.bf16.gmra.mrb[0].mxu0 %v113
  %v1815 = vpop.f32.mrb[0].mxu0
  %v1816 = vadd.f32 0.0, %v1815
  %v1817 = vpop.f32.mrb[0].mxu0
  %v1818 = vpop.f32.mrb[0].mxu0
  %v1819 = vadd.f32 0.0, %v1818
  %v1820 = vpop.f32.mrb[0].mxu0
  %1821 = vmatprep.mubr.bf16.mxu0 0
  %1822 = vmatmul.mubr.bf16.gmra.mrb[0].mxu0 %v116
  %v1823 = vpop.f32.mrb[0].mxu0
  %v1824 = vadd.f32 0.0, %v1823
  %v1825 = vpop.f32.mrb[0].mxu0
  %v1826 = vpop.f32.mrb[0].mxu0
  %v1827 = vadd.f32 0.0, %v1826
  %v1828 = vpop.f32.mrb[0].mxu0
  %1829 = vmatprep.mubr.bf16.mxu0 0
  %1830 = vmatmul.mubr.bf16.gmra.mrb[0].mxu0 %v119
  %v1831 = vpop.f32.mrb[0].mxu0
  %v1832 = vadd.f32 0.0, %v1831
  %v1833 = vpop.f32.mrb[0].mxu0
  %v1834 = vpop.f32.mrb[0].mxu0
  %v1835 = vadd.f32 0.0, %v1834
  %v1836 = vpop.f32.mrb[0].mxu0
  %1837 = vdwg.mxu0
  %v1838 = vpack.c.bf16 %v1811, %v1808
  %v1839 = vpack.c.bf16 %v1819, %v1816
  %v1840 = vpack.c.bf16 %v1827, %v1824
  %v1841 = vpack.c.bf16 %v1835, %v1832
  %v1842 = vlaneseq
  %v1843 = vshrl.u32 %v1842, 7
  %v1844 = vsub.s32 0, %v1843
  %v1845 = vrot.slane %v1762, %v1844
  %v1854 = vunpack.c.l.b16 %v1754
  %v1855 = vunpack.c.l.b16 %v1755
  %v1856 = vunpack.c.l.b16 %v1756
  %v1857 = vunpack.c.l.b16 %v1757
  %v1858 = vunpack.c.l.b16 %v1758
  %v1859 = vunpack.c.l.b16 %v1759
  %v1860 = vunpack.c.l.b16 %v1760
  %v1861 = vunpack.c.l.b16 %v1761
  %v1862 = vpack.c.b16 %v1855, %v1854
  %v1863 = vpack.c.b16 %v1857, %v1856
  %v1864 = vpack.c.b16 %v1859, %v1858
  %v1865 = vpack.c.b16 %v1861, %v1860
  %v1871 = vsel %vm108, %v1838, 0
  %v1874 = vsel %vm108, %v1839, 0
  %v1877 = vsel %vm108, %v1840, 0
  %v1880 = vsel %vm108, %v1841, 0
  %1882 = vmatprep.subr.bf16.mxu0 0
  %1883 = vmatpush1.bf16.msra.mxu0 %v1862
  %1884 = vmatprep.subr.bf16.mxu0 0
  %1885 = vmatpush1.bf16.msra.mxu0 %v1863
  %1886 = vmatprep.subr.bf16.mxu0 0
  %1887 = vmatpush1.bf16.msra.mxu0 %v1864
  %1888 = vmatprep.subr.bf16.mxu0 0
  %1889 = vmatpush1.bf16.msra.mxu0 %v1865
  %1890 = vmatprep.subr.bf16.mxu0 0
  %1891 = vmatpush1.bf16.msra.mxu0 0
  %1892 = vmatprep.subr.bf16.mxu0 0
  %1893 = vmatpush1.bf16.msra.mxu0 0
  %1894 = vmatprep.subr.bf16.mxu0 0
  %1895 = vmatpush1.bf16.msra.mxu0 0
  %1896 = vmatprep.subr.bf16.mxu0 0
  %1897 = vmatpush1.bf16.msra.mxu0 0
  %1898 = vmatprep.subr.bf16.mxu0 0
  %1899 = vmatpush1.bf16.msra.mxu0 0
  %1900 = vmatprep.subr.bf16.mxu0 0
  %1901 = vmatpush1.bf16.msra.mxu0 0
  %1902 = vmatprep.subr.bf16.mxu0 0
  %1903 = vmatpush1.bf16.msra.mxu0 0
  %1904 = vmatprep.subr.bf16.mxu0 0
  %1905 = vmatpush1.bf16.msra.mxu0 0
  %1906 = vmatprep.subr.bf16.mxu0 0
  %1907 = vmatpush1.bf16.msra.mxu0 0
  %1908 = vmatprep.subr.bf16.mxu0 0
  %1909 = vmatpush1.bf16.msra.mxu0 0
  %1910 = vmatprep.subr.bf16.mxu0 0
  %1911 = vmatpush1.bf16.msra.mxu0 0
  %1912 = vmatprep.subr.bf16.mxu0 0
  %1913 = vmatpush1.bf16.msra.mxu0 0
  %1914 = vmatprep.mubr.bf16.mxu0 0
  %1915 = vmatmul.mubr.bf16.gmra.mrb[0].mxu0 %v1871
  %v1916 = vpop.f32.mrb[0].mxu0
  %v1917 = vadd.f32 %v1845, %v1916
  %v1918 = vpop.f32.mrb[0].mxu0
  %v1919 = vpop.f32.mrb[0].mxu0
  %v1920 = vadd.f32 %v1845, %v1919
  %v1921 = vpop.f32.mrb[0].mxu0
  %1922 = vmatprep.mubr.bf16.mxu0 0
  %1923 = vmatmul.mubr.bf16.gmra.mrb[0].mxu0 %v1874
  %v1924 = vpop.f32.mrb[0].mxu0
  %v1925 = vadd.f32 %v1845, %v1924
  %v1926 = vpop.f32.mrb[0].mxu0
  %v1927 = vpop.f32.mrb[0].mxu0
  %v1928 = vadd.f32 %v1845, %v1927
  %v1929 = vpop.f32.mrb[0].mxu0
  %1930 = vmatprep.mubr.bf16.mxu0 0
  %1931 = vmatmul.mubr.bf16.gmra.mrb[0].mxu0 %v1877
  %v1932 = vpop.f32.mrb[0].mxu0
  %v1933 = vadd.f32 %v1845, %v1932
  %v1934 = vpop.f32.mrb[0].mxu0
  %v1935 = vpop.f32.mrb[0].mxu0
  %v1936 = vadd.f32 %v1845, %v1935
  %v1937 = vpop.f32.mrb[0].mxu0
  %1938 = vmatprep.mubr.bf16.mxu0 0
  %1939 = vmatmul.mubr.bf16.gmra.mrb[0].mxu0 %v1880
  %v1940 = vpop.f32.mrb[0].mxu0
  %v1941 = vadd.f32 %v1845, %v1940
  %v1942 = vpop.f32.mrb[0].mxu0
  %v1943 = vpop.f32.mrb[0].mxu0
  %v1944 = vadd.f32 %v1845, %v1943
  %v1945 = vpop.f32.mrb[0].mxu0
  %1946 = vdwg.mxu0
  %v1947 = vmax.f32 %v1917, 0.0
  %v1948 = vmax.f32 %v1920, 0.0
  %v1949 = vmax.f32 %v1925, 0.0
  %v1950 = vmax.f32 %v1928, 0.0
  %v1951 = vmax.f32 %v1933, 0.0
  %v1952 = vmax.f32 %v1936, 0.0
  %v1953 = vmax.f32 %v1941, 0.0
  %v1954 = vmax.f32 %v1944, 0.0
  %v1955 = vpack.c.bf16 %v1948, %v1947
  %v1956 = vpack.c.bf16 %v1950, %v1949
  %v1957 = vpack.c.bf16 %v1952, %v1951
  %v1958 = vpack.c.bf16 %v1954, %v1953
  %v1959 = vlaneseq
  %v1960 = vshrl.u32 %v1959, 7
  %v1961 = vsub.s32 0, %v1960
  %v1962 = vrot.slane %v1772, %v1961
  %v1971 = vunpack.c.l.b16 %v1764
  %v1972 = vunpack.c.l.b16 %v1765
  %v1973 = vunpack.c.l.b16 %v1766
  %v1974 = vunpack.c.l.b16 %v1767
  %v1975 = vunpack.c.l.b16 %v1768
  %v1976 = vunpack.c.l.b16 %v1769
  %v1977 = vunpack.c.l.b16 %v1770
  %v1978 = vunpack.c.l.b16 %v1771
  %v1979 = vpack.c.b16 %v1972, %v1971
  %v1980 = vpack.c.b16 %v1974, %v1973
  %v1981 = vpack.c.b16 %v1976, %v1975
  %v1982 = vpack.c.b16 %v1978, %v1977
  %v1988 = vsel %vm108, %v1955, 0
  %v1991 = vsel %vm108, %v1956, 0
  %v1994 = vsel %vm108, %v1957, 0
  %v1997 = vsel %vm108, %v1958, 0
  %1999 = vmatprep.subr.bf16.mxu0 0
  %2000 = vmatpush1.bf16.msra.mxu0 %v1979
  %2001 = vmatprep.subr.bf16.mxu0 0
  %2002 = vmatpush1.bf16.msra.mxu0 %v1980
  %2003 = vmatprep.subr.bf16.mxu0 0
  %2004 = vmatpush1.bf16.msra.mxu0 %v1981
  %2005 = vmatprep.subr.bf16.mxu0 0
  %2006 = vmatpush1.bf16.msra.mxu0 %v1982
  %2007 = vmatprep.subr.bf16.mxu0 0
  %2008 = vmatpush1.bf16.msra.mxu0 0
  %2009 = vmatprep.subr.bf16.mxu0 0
  %2010 = vmatpush1.bf16.msra.mxu0 0
  %2011 = vmatprep.subr.bf16.mxu0 0
  %2012 = vmatpush1.bf16.msra.mxu0 0
  %2013 = vmatprep.subr.bf16.mxu0 0
  %2014 = vmatpush1.bf16.msra.mxu0 0
  %2015 = vmatprep.subr.bf16.mxu0 0
  %2016 = vmatpush1.bf16.msra.mxu0 0
  %2017 = vmatprep.subr.bf16.mxu0 0
  %2018 = vmatpush1.bf16.msra.mxu0 0
  %2019 = vmatprep.subr.bf16.mxu0 0
  %2020 = vmatpush1.bf16.msra.mxu0 0
  %2021 = vmatprep.subr.bf16.mxu0 0
  %2022 = vmatpush1.bf16.msra.mxu0 0
  %2023 = vmatprep.subr.bf16.mxu0 0
  %2024 = vmatpush1.bf16.msra.mxu0 0
  %2025 = vmatprep.subr.bf16.mxu0 0
  %2026 = vmatpush1.bf16.msra.mxu0 0
  %2027 = vmatprep.subr.bf16.mxu0 0
  %2028 = vmatpush1.bf16.msra.mxu0 0
  %2029 = vmatprep.subr.bf16.mxu0 0
  %2030 = vmatpush1.bf16.msra.mxu0 0
  %2031 = vmatprep.mubr.bf16.mxu0 0
  %2032 = vmatmul.mubr.bf16.gmra.mrb[0].mxu0 %v1988
  %v2033 = vpop.f32.mrb[0].mxu0
  %v2034 = vadd.f32 %v1962, %v2033
  %v2035 = vpop.f32.mrb[0].mxu0
  %v2036 = vpop.f32.mrb[0].mxu0
  %v2037 = vadd.f32 %v1962, %v2036
  %v2038 = vpop.f32.mrb[0].mxu0
  %2039 = vmatprep.mubr.bf16.mxu0 0
  %2040 = vmatmul.mubr.bf16.gmra.mrb[0].mxu0 %v1991
  %v2041 = vpop.f32.mrb[0].mxu0
  %v2042 = vadd.f32 %v1962, %v2041
  %v2043 = vpop.f32.mrb[0].mxu0
  %v2044 = vpop.f32.mrb[0].mxu0
  %v2045 = vadd.f32 %v1962, %v2044
  %v2046 = vpop.f32.mrb[0].mxu0
  %2047 = vmatprep.mubr.bf16.mxu0 0
  %2048 = vmatmul.mubr.bf16.gmra.mrb[0].mxu0 %v1994
  %v2049 = vpop.f32.mrb[0].mxu0
  %v2050 = vadd.f32 %v1962, %v2049
  %v2051 = vpop.f32.mrb[0].mxu0
  %v2052 = vpop.f32.mrb[0].mxu0
  %v2053 = vadd.f32 %v1962, %v2052
  %v2054 = vpop.f32.mrb[0].mxu0
  %2055 = vmatprep.mubr.bf16.mxu0 0
  %2056 = vmatmul.mubr.bf16.gmra.mrb[0].mxu0 %v1997
  %v2057 = vpop.f32.mrb[0].mxu0
  %v2058 = vadd.f32 %v1962, %v2057
  %v2059 = vpop.f32.mrb[0].mxu0
  %v2060 = vpop.f32.mrb[0].mxu0
  %v2061 = vadd.f32 %v1962, %v2060
  %v2062 = vpop.f32.mrb[0].mxu0
  %2063 = vdwg.mxu0
  %v2064 = vmax.f32 %v2034, 0.0
  %v2065 = vmax.f32 %v2037, 0.0
  %v2066 = vmax.f32 %v2042, 0.0
  %v2067 = vmax.f32 %v2045, 0.0
  %v2068 = vmax.f32 %v2050, 0.0
  %v2069 = vmax.f32 %v2053, 0.0
  %v2070 = vmax.f32 %v2058, 0.0
  %v2071 = vmax.f32 %v2061, 0.0
  %v2072 = vpack.c.bf16 %v2065, %v2064
  %v2073 = vpack.c.bf16 %v2067, %v2066
  %v2074 = vpack.c.bf16 %v2069, %v2068
  %v2075 = vpack.c.bf16 %v2071, %v2070
  %s2076 = scalar_lea.vmem %s3, 768
  %v2077 = vld [vmem:[%s2076] sm:$0xf]
  %v2078 = vld [vmem:[%s2076 + $0x4] sm:$0xf]
  %v2079 = vld [vmem:[%s2076 + $0x8] sm:$0xf]
  %v2080 = vld [vmem:[%s2076 + $0xc] sm:$0xf]
  %v2081 = vld [vmem:[%s2076 + $0x10] sm:$0xf]
  %v2082 = vld [vmem:[%s2076 + $0x14] sm:$0xf]
  %v2083 = vld [vmem:[%s2076 + $0x18] sm:$0xf]
  %v2084 = vld [vmem:[%s2076 + $0x1c] sm:$0xf]
  %v2085 = vld [vmem:[%s4 + $0xc] sm:$0x1]
  %s2086 = scalar_lea.vmem %s3, 832
  %v2087 = vld [vmem:[%s2086] sm:$0xf]
  %v2088 = vld [vmem:[%s2086 + $0x4] sm:$0xf]
  %v2089 = vld [vmem:[%s2086 + $0x8] sm:$0xf]
  %v2090 = vld [vmem:[%s2086 + $0xc] sm:$0xf]
  %v2091 = vld [vmem:[%s2086 + $0x10] sm:$0xf]
  %v2092 = vld [vmem:[%s2086 + $0x14] sm:$0xf]
  %v2093 = vld [vmem:[%s2086 + $0x18] sm:$0xf]
  %v2094 = vld [vmem:[%s2086 + $0x1c] sm:$0xf]
  %v2095 = vld [vmem:[%s4 + $0xd] sm:$0x1]
  %2096 = vmatprep.subr.bf16.mxu0 0
  %2097 = vmatpush1.bf16.msra.mxu0 %v2072
  %2098 = vmatprep.subr.bf16.mxu0 0
  %2099 = vmatpush1.bf16.msra.mxu0 %v2073
  %2100 = vmatprep.subr.bf16.mxu0 0
  %2101 = vmatpush1.bf16.msra.mxu0 %v2074
  %2102 = vmatprep.subr.bf16.mxu0 0
  %2103 = vmatpush1.bf16.msra.mxu0 %v2075
  %2104 = vmatprep.subr.bf16.mxu0 0
  %2105 = vmatpush1.bf16.msra.mxu0 0
  %2106 = vmatprep.subr.bf16.mxu0 0
  %2107 = vmatpush1.bf16.msra.mxu0 0
  %2108 = vmatprep.subr.bf16.mxu0 0
  %2109 = vmatpush1.bf16.msra.mxu0 0
  %2110 = vmatprep.subr.bf16.mxu0 0
  %2111 = vmatpush1.bf16.msra.mxu0 0
  %2112 = vmatprep.subr.bf16.mxu0 0
  %2113 = vmatpush1.bf16.msra.mxu0 0
  %2114 = vmatprep.subr.bf16.mxu0 0
  %2115 = vmatpush1.bf16.msra.mxu0 0
  %2116 = vmatprep.subr.bf16.mxu0 0
  %2117 = vmatpush1.bf16.msra.mxu0 0
  %2118 = vmatprep.subr.bf16.mxu0 0
  %2119 = vmatpush1.bf16.msra.mxu0 0
  %2120 = vmatprep.subr.bf16.mxu0 0
  %2121 = vmatpush1.bf16.msra.mxu0 0
  %2122 = vmatprep.subr.bf16.mxu0 0
  %2123 = vmatpush1.bf16.msra.mxu0 0
  %2124 = vmatprep.subr.bf16.mxu0 0
  %2125 = vmatpush1.bf16.msra.mxu0 0
  %2126 = vmatprep.subr.bf16.mxu0 0
  %2127 = vmatpush1.bf16.msra.mxu0 0
  %2128 = vmatprep.mubr.bf16.mxu0 0
  %2129 = vmatmul.mubr.bf16.gmra.mrb[0].mxu0 %v110
  %v2130 = vpop.f32.mrb[0].mxu0
  %v2131 = vadd.f32 0.0, %v2130
  %v2132 = vpop.f32.mrb[0].mxu0
  %v2133 = vpop.f32.mrb[0].mxu0
  %v2134 = vadd.f32 0.0, %v2133
  %v2135 = vpop.f32.mrb[0].mxu0
  %2136 = vmatprep.mubr.bf16.mxu0 0
  %2137 = vmatmul.mubr.bf16.gmra.mrb[0].mxu0 %v113
  %v2138 = vpop.f32.mrb[0].mxu0
  %v2139 = vadd.f32 0.0, %v2138
  %v2140 = vpop.f32.mrb[0].mxu0
  %v2141 = vpop.f32.mrb[0].mxu0
  %v2142 = vadd.f32 0.0, %v2141
  %v2143 = vpop.f32.mrb[0].mxu0
  %2144 = vmatprep.mubr.bf16.mxu0 0
  %2145 = vmatmul.mubr.bf16.gmra.mrb[0].mxu0 %v116
  %v2146 = vpop.f32.mrb[0].mxu0
  %v2147 = vadd.f32 0.0, %v2146
  %v2148 = vpop.f32.mrb[0].mxu0
  %v2149 = vpop.f32.mrb[0].mxu0
  %v2150 = vadd.f32 0.0, %v2149
  %v2151 = vpop.f32.mrb[0].mxu0
  %2152 = vmatprep.mubr.bf16.mxu0 0
  %2153 = vmatmul.mubr.bf16.gmra.mrb[0].mxu0 %v119
  %v2154 = vpop.f32.mrb[0].mxu0
  %v2155 = vadd.f32 0.0, %v2154
  %v2156 = vpop.f32.mrb[0].mxu0
  %v2157 = vpop.f32.mrb[0].mxu0
  %v2158 = vadd.f32 0.0, %v2157
  %v2159 = vpop.f32.mrb[0].mxu0
  %2160 = vdwg.mxu0
  %v2161 = vpack.c.bf16 %v2134, %v2131
  %v2162 = vpack.c.bf16 %v2142, %v2139
  %v2163 = vpack.c.bf16 %v2150, %v2147
  %v2164 = vpack.c.bf16 %v2158, %v2155
  %v2165 = vlaneseq
  %v2166 = vshrl.u32 %v2165, 7
  %v2167 = vsub.s32 0, %v2166
  %v2168 = vrot.slane %v2085, %v2167
  %v2177 = vunpack.c.l.b16 %v2077
  %v2178 = vunpack.c.l.b16 %v2078
  %v2179 = vunpack.c.l.b16 %v2079
  %v2180 = vunpack.c.l.b16 %v2080
  %v2181 = vunpack.c.l.b16 %v2081
  %v2182 = vunpack.c.l.b16 %v2082
  %v2183 = vunpack.c.l.b16 %v2083
  %v2184 = vunpack.c.l.b16 %v2084
  %v2185 = vpack.c.b16 %v2178, %v2177
  %v2186 = vpack.c.b16 %v2180, %v2179
  %v2187 = vpack.c.b16 %v2182, %v2181
  %v2188 = vpack.c.b16 %v2184, %v2183
  %v2194 = vsel %vm108, %v2161, 0
  %v2197 = vsel %vm108, %v2162, 0
  %v2200 = vsel %vm108, %v2163, 0
  %v2203 = vsel %vm108, %v2164, 0
  %2205 = vmatprep.subr.bf16.mxu0 0
  %2206 = vmatpush1.bf16.msra.mxu0 %v2185
  %2207 = vmatprep.subr.bf16.mxu0 0
  %2208 = vmatpush1.bf16.msra.mxu0 %v2186
  %2209 = vmatprep.subr.bf16.mxu0 0
  %2210 = vmatpush1.bf16.msra.mxu0 %v2187
  %2211 = vmatprep.subr.bf16.mxu0 0
  %2212 = vmatpush1.bf16.msra.mxu0 %v2188
  %2213 = vmatprep.subr.bf16.mxu0 0
  %2214 = vmatpush1.bf16.msra.mxu0 0
  %2215 = vmatprep.subr.bf16.mxu0 0
  %2216 = vmatpush1.bf16.msra.mxu0 0
  %2217 = vmatprep.subr.bf16.mxu0 0
  %2218 = vmatpush1.bf16.msra.mxu0 0
  %2219 = vmatprep.subr.bf16.mxu0 0
  %2220 = vmatpush1.bf16.msra.mxu0 0
  %2221 = vmatprep.subr.bf16.mxu0 0
  %2222 = vmatpush1.bf16.msra.mxu0 0
  %2223 = vmatprep.subr.bf16.mxu0 0
  %2224 = vmatpush1.bf16.msra.mxu0 0
  %2225 = vmatprep.subr.bf16.mxu0 0
  %2226 = vmatpush1.bf16.msra.mxu0 0
  %2227 = vmatprep.subr.bf16.mxu0 0
  %2228 = vmatpush1.bf16.msra.mxu0 0
  %2229 = vmatprep.subr.bf16.mxu0 0
  %2230 = vmatpush1.bf16.msra.mxu0 0
  %2231 = vmatprep.subr.bf16.mxu0 0
  %2232 = vmatpush1.bf16.msra.mxu0 0
  %2233 = vmatprep.subr.bf16.mxu0 0
  %2234 = vmatpush1.bf16.msra.mxu0 0
  %2235 = vmatprep.subr.bf16.mxu0 0
  %2236 = vmatpush1.bf16.msra.mxu0 0
  %2237 = vmatprep.mubr.bf16.mxu0 0
  %2238 = vmatmul.mubr.bf16.gmra.mrb[0].mxu0 %v2194
  %v2239 = vpop.f32.mrb[0].mxu0
  %v2240 = vadd.f32 %v2168, %v2239
  %v2241 = vpop.f32.mrb[0].mxu0
  %v2242 = vpop.f32.mrb[0].mxu0
  %v2243 = vadd.f32 %v2168, %v2242
  %v2244 = vpop.f32.mrb[0].mxu0
  %2245 = vmatprep.mubr.bf16.mxu0 0
  %2246 = vmatmul.mubr.bf16.gmra.mrb[0].mxu0 %v2197
  %v2247 = vpop.f32.mrb[0].mxu0
  %v2248 = vadd.f32 %v2168, %v2247
  %v2249 = vpop.f32.mrb[0].mxu0
  %v2250 = vpop.f32.mrb[0].mxu0
  %v2251 = vadd.f32 %v2168, %v2250
  %v2252 = vpop.f32.mrb[0].mxu0
  %2253 = vmatprep.mubr.bf16.mxu0 0
  %2254 = vmatmul.mubr.bf16.gmra.mrb[0].mxu0 %v2200
  %v2255 = vpop.f32.mrb[0].mxu0
  %v2256 = vadd.f32 %v2168, %v2255
  %v2257 = vpop.f32.mrb[0].mxu0
  %v2258 = vpop.f32.mrb[0].mxu0
  %v2259 = vadd.f32 %v2168, %v2258
  %v2260 = vpop.f32.mrb[0].mxu0
  %2261 = vmatprep.mubr.bf16.mxu0 0
  %2262 = vmatmul.mubr.bf16.gmra.mrb[0].mxu0 %v2203
  %v2263 = vpop.f32.mrb[0].mxu0
  %v2264 = vadd.f32 %v2168, %v2263
  %v2265 = vpop.f32.mrb[0].mxu0
  %v2266 = vpop.f32.mrb[0].mxu0
  %v2267 = vadd.f32 %v2168, %v2266
  %v2268 = vpop.f32.mrb[0].mxu0
  %2269 = vdwg.mxu0
  %v2270 = vmax.f32 %v2240, 0.0
  %v2271 = vmax.f32 %v2243, 0.0
  %v2272 = vmax.f32 %v2248, 0.0
  %v2273 = vmax.f32 %v2251, 0.0
  %v2274 = vmax.f32 %v2256, 0.0
  %v2275 = vmax.f32 %v2259, 0.0
  %v2276 = vmax.f32 %v2264, 0.0
  %v2277 = vmax.f32 %v2267, 0.0
  %v2278 = vpack.c.bf16 %v2271, %v2270
  %v2279 = vpack.c.bf16 %v2273, %v2272
  %v2280 = vpack.c.bf16 %v2275, %v2274
  %v2281 = vpack.c.bf16 %v2277, %v2276
  %v2282 = vlaneseq
  %v2283 = vshrl.u32 %v2282, 7
  %v2284 = vsub.s32 0, %v2283
  %v2285 = vrot.slane %v2095, %v2284
  %v2294 = vunpack.c.l.b16 %v2087
  %v2295 = vunpack.c.l.b16 %v2088
  %v2296 = vunpack.c.l.b16 %v2089
  %v2297 = vunpack.c.l.b16 %v2090
  %v2298 = vunpack.c.l.b16 %v2091
  %v2299 = vunpack.c.l.b16 %v2092
  %v2300 = vunpack.c.l.b16 %v2093
  %v2301 = vunpack.c.l.b16 %v2094
  %v2302 = vpack.c.b16 %v2295, %v2294
  %v2303 = vpack.c.b16 %v2297, %v2296
  %v2304 = vpack.c.b16 %v2299, %v2298
  %v2305 = vpack.c.b16 %v2301, %v2300
  %v2311 = vsel %vm108, %v2278, 0
  %v2314 = vsel %vm108, %v2279, 0
  %v2317 = vsel %vm108, %v2280, 0
  %v2320 = vsel %vm108, %v2281, 0
  %2322 = vmatprep.subr.bf16.mxu0 0
  %2323 = vmatpush1.bf16.msra.mxu0 %v2302
  %2324 = vmatprep.subr.bf16.mxu0 0
  %2325 = vmatpush1.bf16.msra.mxu0 %v2303
  %2326 = vmatprep.subr.bf16.mxu0 0
  %2327 = vmatpush1.bf16.msra.mxu0 %v2304
  %2328 = vmatprep.subr.bf16.mxu0 0
  %2329 = vmatpush1.bf16.msra.mxu0 %v2305
  %2330 = vmatprep.subr.bf16.mxu0 0
  %2331 = vmatpush1.bf16.msra.mxu0 0
  %2332 = vmatprep.subr.bf16.mxu0 0
  %2333 = vmatpush1.bf16.msra.mxu0 0
  %2334 = vmatprep.subr.bf16.mxu0 0
  %2335 = vmatpush1.bf16.msra.mxu0 0
  %2336 = vmatprep.subr.bf16.mxu0 0
  %2337 = vmatpush1.bf16.msra.mxu0 0
  %2338 = vmatprep.subr.bf16.mxu0 0
  %2339 = vmatpush1.bf16.msra.mxu0 0
  %2340 = vmatprep.subr.bf16.mxu0 0
  %2341 = vmatpush1.bf16.msra.mxu0 0
  %2342 = vmatprep.subr.bf16.mxu0 0
  %2343 = vmatpush1.bf16.msra.mxu0 0
  %2344 = vmatprep.subr.bf16.mxu0 0
  %2345 = vmatpush1.bf16.msra.mxu0 0
  %2346 = vmatprep.subr.bf16.mxu0 0
  %2347 = vmatpush1.bf16.msra.mxu0 0
  %2348 = vmatprep.subr.bf16.mxu0 0
  %2349 = vmatpush1.bf16.msra.mxu0 0
  %2350 = vmatprep.subr.bf16.mxu0 0
  %2351 = vmatpush1.bf16.msra.mxu0 0
  %2352 = vmatprep.subr.bf16.mxu0 0
  %2353 = vmatpush1.bf16.msra.mxu0 0
  %2354 = vmatprep.mubr.bf16.mxu0 0
  %2355 = vmatmul.mubr.bf16.gmra.mrb[0].mxu0 %v2311
  %v2356 = vpop.f32.mrb[0].mxu0
  %v2357 = vadd.f32 %v2285, %v2356
  %v2358 = vpop.f32.mrb[0].mxu0
  %v2359 = vpop.f32.mrb[0].mxu0
  %v2360 = vadd.f32 %v2285, %v2359
  %v2361 = vpop.f32.mrb[0].mxu0
  %2362 = vmatprep.mubr.bf16.mxu0 0
  %2363 = vmatmul.mubr.bf16.gmra.mrb[0].mxu0 %v2314
  %v2364 = vpop.f32.mrb[0].mxu0
  %v2365 = vadd.f32 %v2285, %v2364
  %v2366 = vpop.f32.mrb[0].mxu0
  %v2367 = vpop.f32.mrb[0].mxu0
  %v2368 = vadd.f32 %v2285, %v2367
  %v2369 = vpop.f32.mrb[0].mxu0
  %2370 = vmatprep.mubr.bf16.mxu0 0
  %2371 = vmatmul.mubr.bf16.gmra.mrb[0].mxu0 %v2317
  %v2372 = vpop.f32.mrb[0].mxu0
  %v2373 = vadd.f32 %v2285, %v2372
  %v2374 = vpop.f32.mrb[0].mxu0
  %v2375 = vpop.f32.mrb[0].mxu0
  %v2376 = vadd.f32 %v2285, %v2375
  %v2377 = vpop.f32.mrb[0].mxu0
  %2378 = vmatprep.mubr.bf16.mxu0 0
  %2379 = vmatmul.mubr.bf16.gmra.mrb[0].mxu0 %v2320
  %v2380 = vpop.f32.mrb[0].mxu0
  %v2381 = vadd.f32 %v2285, %v2380
  %v2382 = vpop.f32.mrb[0].mxu0
  %v2383 = vpop.f32.mrb[0].mxu0
  %v2384 = vadd.f32 %v2285, %v2383
  %v2385 = vpop.f32.mrb[0].mxu0
  %2386 = vdwg.mxu0
  %v2387 = vmax.f32 %v2357, 0.0
  %v2388 = vmax.f32 %v2360, 0.0
  %v2389 = vmax.f32 %v2365, 0.0
  %v2390 = vmax.f32 %v2368, 0.0
  %v2391 = vmax.f32 %v2373, 0.0
  %v2392 = vmax.f32 %v2376, 0.0
  %v2393 = vmax.f32 %v2381, 0.0
  %v2394 = vmax.f32 %v2384, 0.0
  %v2395 = vpack.c.bf16 %v2388, %v2387
  %v2396 = vpack.c.bf16 %v2390, %v2389
  %v2397 = vpack.c.bf16 %v2392, %v2391
  %v2398 = vpack.c.bf16 %v2394, %v2393
  %s2399 = scalar_lea.vmem %s3, 896
  %v2400 = vld [vmem:[%s2399] sm:$0xf]
  %v2401 = vld [vmem:[%s2399 + $0x4] sm:$0xf]
  %v2402 = vld [vmem:[%s2399 + $0x8] sm:$0xf]
  %v2403 = vld [vmem:[%s2399 + $0xc] sm:$0xf]
  %v2404 = vld [vmem:[%s2399 + $0x10] sm:$0xf]
  %v2405 = vld [vmem:[%s2399 + $0x14] sm:$0xf]
  %v2406 = vld [vmem:[%s2399 + $0x18] sm:$0xf]
  %v2407 = vld [vmem:[%s2399 + $0x1c] sm:$0xf]
  %v2408 = vld [vmem:[%s4 + $0xe] sm:$0x1]
  %s2409 = scalar_lea.vmem %s3, 960
  %v2410 = vld [vmem:[%s2409] sm:$0xf]
  %v2411 = vld [vmem:[%s2409 + $0x4] sm:$0xf]
  %v2412 = vld [vmem:[%s2409 + $0x8] sm:$0xf]
  %v2413 = vld [vmem:[%s2409 + $0xc] sm:$0xf]
  %v2414 = vld [vmem:[%s2409 + $0x10] sm:$0xf]
  %v2415 = vld [vmem:[%s2409 + $0x14] sm:$0xf]
  %v2416 = vld [vmem:[%s2409 + $0x18] sm:$0xf]
  %v2417 = vld [vmem:[%s2409 + $0x1c] sm:$0xf]
  %v2418 = vld [vmem:[%s4 + $0xf] sm:$0x1]
  %2419 = vmatprep.subr.bf16.mxu0 0
  %2420 = vmatpush1.bf16.msra.mxu0 %v2395
  %2421 = vmatprep.subr.bf16.mxu0 0
  %2422 = vmatpush1.bf16.msra.mxu0 %v2396
  %2423 = vmatprep.subr.bf16.mxu0 0
  %2424 = vmatpush1.bf16.msra.mxu0 %v2397
  %2425 = vmatprep.subr.bf16.mxu0 0
  %2426 = vmatpush1.bf16.msra.mxu0 %v2398
  %2427 = vmatprep.subr.bf16.mxu0 0
  %2428 = vmatpush1.bf16.msra.mxu0 0
  %2429 = vmatprep.subr.bf16.mxu0 0
  %2430 = vmatpush1.bf16.msra.mxu0 0
  %2431 = vmatprep.subr.bf16.mxu0 0
  %2432 = vmatpush1.bf16.msra.mxu0 0
  %2433 = vmatprep.subr.bf16.mxu0 0
  %2434 = vmatpush1.bf16.msra.mxu0 0
  %2435 = vmatprep.subr.bf16.mxu0 0
  %2436 = vmatpush1.bf16.msra.mxu0 0
  %2437 = vmatprep.subr.bf16.mxu0 0
  %2438 = vmatpush1.bf16.msra.mxu0 0
  %2439 = vmatprep.subr.bf16.mxu0 0
  %2440 = vmatpush1.bf16.msra.mxu0 0
  %2441 = vmatprep.subr.bf16.mxu0 0
  %2442 = vmatpush1.bf16.msra.mxu0 0
  %2443 = vmatprep.subr.bf16.mxu0 0
  %2444 = vmatpush1.bf16.msra.mxu0 0
  %2445 = vmatprep.subr.bf16.mxu0 0
  %2446 = vmatpush1.bf16.msra.mxu0 0
  %2447 = vmatprep.subr.bf16.mxu0 0
  %2448 = vmatpush1.bf16.msra.mxu0 0
  %2449 = vmatprep.subr.bf16.mxu0 0
  %2450 = vmatpush1.bf16.msra.mxu0 0
  %2451 = vmatprep.mubr.bf16.mxu0 0
  %2452 = vmatmul.mubr.bf16.gmra.mrb[0].mxu0 %v110
  %v2453 = vpop.f32.mrb[0].mxu0
  %v2454 = vadd.f32 0.0, %v2453
  %v2455 = vpop.f32.mrb[0].mxu0
  %v2456 = vpop.f32.mrb[0].mxu0
  %v2457 = vadd.f32 0.0, %v2456
  %v2458 = vpop.f32.mrb[0].mxu0
  %2459 = vmatprep.mubr.bf16.mxu0 0
  %2460 = vmatmul.mubr.bf16.gmra.mrb[0].mxu0 %v113
  %v2461 = vpop.f32.mrb[0].mxu0
  %v2462 = vadd.f32 0.0, %v2461
  %v2463 = vpop.f32.mrb[0].mxu0
  %v2464 = vpop.f32.mrb[0].mxu0
  %v2465 = vadd.f32 0.0, %v2464
  %v2466 = vpop.f32.mrb[0].mxu0
  %2467 = vmatprep.mubr.bf16.mxu0 0
  %2468 = vmatmul.mubr.bf16.gmra.mrb[0].mxu0 %v116
  %v2469 = vpop.f32.mrb[0].mxu0
  %v2470 = vadd.f32 0.0, %v2469
  %v2471 = vpop.f32.mrb[0].mxu0
  %v2472 = vpop.f32.mrb[0].mxu0
  %v2473 = vadd.f32 0.0, %v2472
  %v2474 = vpop.f32.mrb[0].mxu0
  %2475 = vmatprep.mubr.bf16.mxu0 0
  %2476 = vmatmul.mubr.bf16.gmra.mrb[0].mxu0 %v119
  %v2477 = vpop.f32.mrb[0].mxu0
  %v2478 = vadd.f32 0.0, %v2477
  %v2479 = vpop.f32.mrb[0].mxu0
  %v2480 = vpop.f32.mrb[0].mxu0
  %v2481 = vadd.f32 0.0, %v2480
  %v2482 = vpop.f32.mrb[0].mxu0
  %2483 = vdwg.mxu0
  %v2484 = vpack.c.bf16 %v2457, %v2454
  %v2485 = vpack.c.bf16 %v2465, %v2462
  %v2486 = vpack.c.bf16 %v2473, %v2470
  %v2487 = vpack.c.bf16 %v2481, %v2478
  %v2488 = vlaneseq
  %v2489 = vshrl.u32 %v2488, 7
  %v2490 = vsub.s32 0, %v2489
  %v2491 = vrot.slane %v2408, %v2490
  %v2500 = vunpack.c.l.b16 %v2400
  %v2501 = vunpack.c.l.b16 %v2401
  %v2502 = vunpack.c.l.b16 %v2402
  %v2503 = vunpack.c.l.b16 %v2403
  %v2504 = vunpack.c.l.b16 %v2404
  %v2505 = vunpack.c.l.b16 %v2405
  %v2506 = vunpack.c.l.b16 %v2406
  %v2507 = vunpack.c.l.b16 %v2407
  %v2508 = vpack.c.b16 %v2501, %v2500
  %v2509 = vpack.c.b16 %v2503, %v2502
  %v2510 = vpack.c.b16 %v2505, %v2504
  %v2511 = vpack.c.b16 %v2507, %v2506
  %v2517 = vsel %vm108, %v2484, 0
  %v2520 = vsel %vm108, %v2485, 0
  %v2523 = vsel %vm108, %v2486, 0
  %v2526 = vsel %vm108, %v2487, 0
  %2528 = vmatprep.subr.bf16.mxu0 0
  %2529 = vmatpush1.bf16.msra.mxu0 %v2508
  %2530 = vmatprep.subr.bf16.mxu0 0
  %2531 = vmatpush1.bf16.msra.mxu0 %v2509
  %2532 = vmatprep.subr.bf16.mxu0 0
  %2533 = vmatpush1.bf16.msra.mxu0 %v2510
  %2534 = vmatprep.subr.bf16.mxu0 0
  %2535 = vmatpush1.bf16.msra.mxu0 %v2511
  %2536 = vmatprep.subr.bf16.mxu0 0
  %2537 = vmatpush1.bf16.msra.mxu0 0
  %2538 = vmatprep.subr.bf16.mxu0 0
  %2539 = vmatpush1.bf16.msra.mxu0 0
  %2540 = vmatprep.subr.bf16.mxu0 0
  %2541 = vmatpush1.bf16.msra.mxu0 0
  %2542 = vmatprep.subr.bf16.mxu0 0
  %2543 = vmatpush1.bf16.msra.mxu0 0
  %2544 = vmatprep.subr.bf16.mxu0 0
  %2545 = vmatpush1.bf16.msra.mxu0 0
  %2546 = vmatprep.subr.bf16.mxu0 0
  %2547 = vmatpush1.bf16.msra.mxu0 0
  %2548 = vmatprep.subr.bf16.mxu0 0
  %2549 = vmatpush1.bf16.msra.mxu0 0
  %2550 = vmatprep.subr.bf16.mxu0 0
  %2551 = vmatpush1.bf16.msra.mxu0 0
  %2552 = vmatprep.subr.bf16.mxu0 0
  %2553 = vmatpush1.bf16.msra.mxu0 0
  %2554 = vmatprep.subr.bf16.mxu0 0
  %2555 = vmatpush1.bf16.msra.mxu0 0
  %2556 = vmatprep.subr.bf16.mxu0 0
  %2557 = vmatpush1.bf16.msra.mxu0 0
  %2558 = vmatprep.subr.bf16.mxu0 0
  %2559 = vmatpush1.bf16.msra.mxu0 0
  %2560 = vmatprep.mubr.bf16.mxu0 0
  %2561 = vmatmul.mubr.bf16.gmra.mrb[0].mxu0 %v2517
  %v2562 = vpop.f32.mrb[0].mxu0
  %v2563 = vadd.f32 %v2491, %v2562
  %v2564 = vpop.f32.mrb[0].mxu0
  %v2565 = vpop.f32.mrb[0].mxu0
  %v2566 = vadd.f32 %v2491, %v2565
  %v2567 = vpop.f32.mrb[0].mxu0
  %2568 = vmatprep.mubr.bf16.mxu0 0
  %2569 = vmatmul.mubr.bf16.gmra.mrb[0].mxu0 %v2520
  %v2570 = vpop.f32.mrb[0].mxu0
  %v2571 = vadd.f32 %v2491, %v2570
  %v2572 = vpop.f32.mrb[0].mxu0
  %v2573 = vpop.f32.mrb[0].mxu0
  %v2574 = vadd.f32 %v2491, %v2573
  %v2575 = vpop.f32.mrb[0].mxu0
  %2576 = vmatprep.mubr.bf16.mxu0 0
  %2577 = vmatmul.mubr.bf16.gmra.mrb[0].mxu0 %v2523
  %v2578 = vpop.f32.mrb[0].mxu0
  %v2579 = vadd.f32 %v2491, %v2578
  %v2580 = vpop.f32.mrb[0].mxu0
  %v2581 = vpop.f32.mrb[0].mxu0
  %v2582 = vadd.f32 %v2491, %v2581
  %v2583 = vpop.f32.mrb[0].mxu0
  %2584 = vmatprep.mubr.bf16.mxu0 0
  %2585 = vmatmul.mubr.bf16.gmra.mrb[0].mxu0 %v2526
  %v2586 = vpop.f32.mrb[0].mxu0
  %v2587 = vadd.f32 %v2491, %v2586
  %v2588 = vpop.f32.mrb[0].mxu0
  %v2589 = vpop.f32.mrb[0].mxu0
  %v2590 = vadd.f32 %v2491, %v2589
  %v2591 = vpop.f32.mrb[0].mxu0
  %2592 = vdwg.mxu0
  %v2593 = vmax.f32 %v2563, 0.0
  %v2594 = vmax.f32 %v2566, 0.0
  %v2595 = vmax.f32 %v2571, 0.0
  %v2596 = vmax.f32 %v2574, 0.0
  %v2597 = vmax.f32 %v2579, 0.0
  %v2598 = vmax.f32 %v2582, 0.0
  %v2599 = vmax.f32 %v2587, 0.0
  %v2600 = vmax.f32 %v2590, 0.0
  %v2601 = vpack.c.bf16 %v2594, %v2593
  %v2602 = vpack.c.bf16 %v2596, %v2595
  %v2603 = vpack.c.bf16 %v2598, %v2597
  %v2604 = vpack.c.bf16 %v2600, %v2599
  %v2605 = vlaneseq
  %v2606 = vshrl.u32 %v2605, 7
  %v2607 = vsub.s32 0, %v2606
  %v2608 = vrot.slane %v2418, %v2607
  %v2617 = vunpack.c.l.b16 %v2410
  %v2618 = vunpack.c.l.b16 %v2411
  %v2619 = vunpack.c.l.b16 %v2412
  %v2620 = vunpack.c.l.b16 %v2413
  %v2621 = vunpack.c.l.b16 %v2414
  %v2622 = vunpack.c.l.b16 %v2415
  %v2623 = vunpack.c.l.b16 %v2416
  %v2624 = vunpack.c.l.b16 %v2417
  %v2625 = vpack.c.b16 %v2618, %v2617
  %v2626 = vpack.c.b16 %v2620, %v2619
  %v2627 = vpack.c.b16 %v2622, %v2621
  %v2628 = vpack.c.b16 %v2624, %v2623
  %v2634 = vsel %vm108, %v2601, 0
  %v2637 = vsel %vm108, %v2602, 0
  %v2640 = vsel %vm108, %v2603, 0
  %v2643 = vsel %vm108, %v2604, 0
  %2645 = vmatprep.subr.bf16.mxu0 0
  %2646 = vmatpush1.bf16.msra.mxu0 %v2625
  %2647 = vmatprep.subr.bf16.mxu0 0
  %2648 = vmatpush1.bf16.msra.mxu0 %v2626
  %2649 = vmatprep.subr.bf16.mxu0 0
  %2650 = vmatpush1.bf16.msra.mxu0 %v2627
  %2651 = vmatprep.subr.bf16.mxu0 0
  %2652 = vmatpush1.bf16.msra.mxu0 %v2628
  %2653 = vmatprep.subr.bf16.mxu0 0
  %2654 = vmatpush1.bf16.msra.mxu0 0
  %2655 = vmatprep.subr.bf16.mxu0 0
  %2656 = vmatpush1.bf16.msra.mxu0 0
  %2657 = vmatprep.subr.bf16.mxu0 0
  %2658 = vmatpush1.bf16.msra.mxu0 0
  %2659 = vmatprep.subr.bf16.mxu0 0
  %2660 = vmatpush1.bf16.msra.mxu0 0
  %2661 = vmatprep.subr.bf16.mxu0 0
  %2662 = vmatpush1.bf16.msra.mxu0 0
  %2663 = vmatprep.subr.bf16.mxu0 0
  %2664 = vmatpush1.bf16.msra.mxu0 0
  %2665 = vmatprep.subr.bf16.mxu0 0
  %2666 = vmatpush1.bf16.msra.mxu0 0
  %2667 = vmatprep.subr.bf16.mxu0 0
  %2668 = vmatpush1.bf16.msra.mxu0 0
  %2669 = vmatprep.subr.bf16.mxu0 0
  %2670 = vmatpush1.bf16.msra.mxu0 0
  %2671 = vmatprep.subr.bf16.mxu0 0
  %2672 = vmatpush1.bf16.msra.mxu0 0
  %2673 = vmatprep.subr.bf16.mxu0 0
  %2674 = vmatpush1.bf16.msra.mxu0 0
  %2675 = vmatprep.subr.bf16.mxu0 0
  %2676 = vmatpush1.bf16.msra.mxu0 0
  %2677 = vmatprep.mubr.bf16.mxu0 0
  %2678 = vmatmul.mubr.bf16.gmra.mrb[0].mxu0 %v2634
  %v2679 = vpop.f32.mrb[0].mxu0
  %v2680 = vadd.f32 %v2608, %v2679
  %v2681 = vpop.f32.mrb[0].mxu0
  %v2682 = vpop.f32.mrb[0].mxu0
  %v2683 = vadd.f32 %v2608, %v2682
  %v2684 = vpop.f32.mrb[0].mxu0
  %2685 = vmatprep.mubr.bf16.mxu0 0
  %2686 = vmatmul.mubr.bf16.gmra.mrb[0].mxu0 %v2637
  %v2687 = vpop.f32.mrb[0].mxu0
  %v2688 = vadd.f32 %v2608, %v2687
  %v2689 = vpop.f32.mrb[0].mxu0
  %v2690 = vpop.f32.mrb[0].mxu0
  %v2691 = vadd.f32 %v2608, %v2690
  %v2692 = vpop.f32.mrb[0].mxu0
  %2693 = vmatprep.mubr.bf16.mxu0 0
  %2694 = vmatmul.mubr.bf16.gmra.mrb[0].mxu0 %v2640
  %v2695 = vpop.f32.mrb[0].mxu0
  %v2696 = vadd.f32 %v2608, %v2695
  %v2697 = vpop.f32.mrb[0].mxu0
  %v2698 = vpop.f32.mrb[0].mxu0
  %v2699 = vadd.f32 %v2608, %v2698
  %v2700 = vpop.f32.mrb[0].mxu0
  %2701 = vmatprep.mubr.bf16.mxu0 0
  %2702 = vmatmul.mubr.bf16.gmra.mrb[0].mxu0 %v2643
  %v2703 = vpop.f32.mrb[0].mxu0
  %v2704 = vadd.f32 %v2608, %v2703
  %v2705 = vpop.f32.mrb[0].mxu0
  %v2706 = vpop.f32.mrb[0].mxu0
  %v2707 = vadd.f32 %v2608, %v2706
  %v2708 = vpop.f32.mrb[0].mxu0
  %2709 = vdwg.mxu0
  %2710 = vst [vmem:[%s5] sm:$0xff] %v2680
  %2711 = vst [vmem:[%s5 + $0x8] sm:$0xff] %v2683
  %2712 = vst [vmem:[%s5 + $0x10] sm:$0xff] %v2688
  %2713 = vst [vmem:[%s5 + $0x18] sm:$0xff] %v2691
  %2714 = vst [vmem:[%s5 + $0x20] sm:$0xff] %v2696
  %2715 = vst [vmem:[%s5 + $0x28] sm:$0xff] %v2699
  %2716 = vst [vmem:[%s5 + $0x30] sm:$0xff] %v2704
  %2717 = vst [vmem:[%s5 + $0x38] sm:$0xff] %v2707
  // Predicated region
  $region22: #{graphmae_forward.3} parent=0 // pred_check
    _
  $region23: #{graphmae_forward.3} parent=0 // pred_check_branch
    %2719 = sbr.rel (0) target = $region25
  $region24: #{graphmae_forward.3} parent=0 // pred_region
    _
  $region25: #{graphmae_forward.3} parent=0 // pred_fallthru
    _
  // Predicated region
  $region26: #{graphmae_forward.3} parent=0 // pred_check
    _
  $region27: #{graphmae_forward.3} parent=0 // pred_check_branch
    %2721 = sbr.rel (0) target = $region29
  $region28: #{graphmae_forward.3} parent=0 // pred_region
    _
  $region29: #{graphmae_forward.3} parent=0 // pred_fallthru
    _

</llo_original>
